<compile_context>
chip_gen: v5e
topology: v5e:2x2
jax: 0.10.0
libtpu: 0.0.40
codegen_flags: <defaults>
</compile_context>

<pallas_src>
import functools
import math

import jax
import jax.numpy as jnp
from jax.experimental import pallas as pl
from jax.experimental.pallas import tpu as pltpu

F32 = jnp.float32
BF16 = jnp.bfloat16


def _round_up(x, m):
    return ((x + m - 1) // m) * m


def _largest_div128(p, cap):
    """Largest multiple-of-128 divisor of p (p is a multiple of 128) that is <= cap."""
    cap = max(128, min(p, (cap // 128) * 128))
    for t in range(cap, 127, -128):
        if p % t == 0:
            return t
    return 128


# --------------------------------------------------------------------------------------
# Matmul + bias kernel  (A @ W + b, bf16 operands, f32 accumulate, bf16 out)
# --------------------------------------------------------------------------------------

def _matmul_bias_kernel(a_ref, b_ref, bias_ref, o_ref, acc_ref):
    k = pl.program_id(1)

    @pl.when(k == 0)
    def _():
        acc_ref[...] = jnp.zeros_like(acc_ref)

    acc_ref[...] += jnp.dot(a_ref[...], b_ref[...], preferred_element_type=jnp.float32)

    @pl.when(k == pl.num_programs(1) - 1)
    def _():
        o_ref[...] = (acc_ref[...] + bias_ref[...]).astype(o_ref.dtype)


_MM_CACHE = {}


def _matmul_fn(Mp, Kp, Np):
    key = (Mp, Kp, Np)
    if key not in _MM_CACHE:
        tn = _largest_div128(Np, 512)                       # N tile ("parallel" axis)
        tk_cap = (1 << 20) // tn                            # B tile <= 2 MB bf16 per buffer
        if Kp >= 512:
            tk_cap = min(tk_cap, Kp // 4)                   # >= 4 K steps -> DMA overlap
        tk = _largest_div128(Kp, tk_cap)
        fn = pl.pallas_call(
            _matmul_bias_kernel,
            out_shape=jax.ShapeDtypeStruct((Mp, Np), BF16),
            grid=(Np // tn, Kp // tk),                      # K innermost (reduction)
            in_specs=[
                pl.BlockSpec((Mp, tk), lambda n, k: (0, k)),   # activation panel
                pl.BlockSpec((tk, tn), lambda n, k: (k, n)),   # weight tile (streamed)
                pl.BlockSpec((1, tn), lambda n, k: (0, n)),    # bias tile
            ],
            out_specs=pl.BlockSpec((Mp, tn), lambda n, k: (0, n)),
            scratch_shapes=[pltpu.VMEM((Mp, tn), F32)],        # resident accumulator
            compiler_params=pltpu.CompilerParams(
                dimension_semantics=("parallel", "arbitrary")),
        )
        _MM_CACHE[key] = jax.jit(fn)
    return _MM_CACHE[key]


def matmul(a, w_padded, b_padded, n_out):
    """a: (M, K) bf16/f32.  w_padded: (Kp, Np) bf16 zero-padded.  b_padded: (1, Np) f32."""
    M, K = a.shape
    Kp, Np = w_padded.shape
    Mp = _round_up(max(M, 16), 16)                          # bf16 sublane packing
    a = a.astype(BF16)
    if Mp != M or Kp != K:
        # TODO(synk): keep activations in 128-padded layout end-to-end to drop this pad.
        a = jnp.pad(a, ((0, Mp - M), (0, Kp - K)))
    out = _matmul_fn(Mp, Kp, Np)(a, w_padded, b_padded)
    if Mp != M or Np != n_out:
        out = out[:M, :n_out]
    return out


# --------------------------------------------------------------------------------------
# GroupNorm kernel (NHWC blocks, one-hot group matmul for stats, fused affine + SiLU)
# --------------------------------------------------------------------------------------

def _group_norm_kernel(x_ref, mt_ref, g_ref, b_ref, o_ref, *, eps, inv_count, do_silu):
    x = x_ref[...].astype(jnp.float32)                      # (HW, C)
    mt = mt_ref[...]                                        # (G, C) one-hot, f32
    # per-group sums via MXU (contract over channels), then broadcast back per channel
    gsum = jax.lax.dot_general(x, mt, (((1,), (1,)), ((), ())),
                               preferred_element_type=jnp.float32)       # (HW, G)
    mean_g = jnp.sum(gsum, axis=0, keepdims=True) * inv_count            # (1, G)
    mean_c = jnp.dot(mean_g, mt, preferred_element_type=jnp.float32)     # (1, C)
    xc = x - mean_c
    vsum = jax.lax.dot_general(xc * xc, mt, (((1,), (1,)), ((), ())),
                               preferred_element_type=jnp.float32)
    var_g = jnp.sum(vsum, axis=0, keepdims=True) * inv_count             # biased (torch)
    inv_g = jax.lax.rsqrt(var_g + eps)
    inv_c = jnp.dot(inv_g, mt, preferred_element_type=jnp.float32)       # (1, C)
    y = xc * inv_c * g_ref[...] + b_ref[...]
    if do_silu:
        y = y * jax.nn.sigmoid(y)
    o_ref[...] = y.astype(o_ref.dtype)


_GN_CACHE = {}
_ONEHOT_CACHE = {}
_GROUPS = 32


def _group_onehot(C):
    if C not in _ONEHOT_CACHE:
        cg = C // _GROUPS
        grp = jnp.arange(C) // cg
        _ONEHOT_CACHE[C] = (grp[None, :] == jnp.arange(_GROUPS)[:, None]).astype(F32)
    return _ONEHOT_CACHE[C]


def group_norm(x, aff, eps, do_silu=False):
    """nn.GroupNorm(32, C) on NHWC input; affine + optional SiLU fused into the kernel."""
    N, H, W, C = x.shape
    HW = H * W
    mt = _group_onehot(C)
    key = (N, HW, C, x.dtype, float(eps), bool(do_silu))
    if key not in _GN_CACHE:
        fn = pl.pallas_call(
            functools.partial(_group_norm_kernel, eps=float(eps),
                              inv_count=1.0 / (HW * (C // _GROUPS)),
                              do_silu=bool(do_silu)),
            out_shape=jax.ShapeDtypeStruct((N, HW, C), BF16),
            grid=(N,),
            in_specs=[pl.BlockSpec((None, HW, C), lambda i: (i, 0, 0)),
                      pl.BlockSpec((_GROUPS, C), lambda i: (0, 0)),
                      pl.BlockSpec((1, C), lambda i: (0, 0)),
                      pl.BlockSpec((1, C), lambda i: (0, 0))],
            out_specs=pl.BlockSpec((None, HW, C), lambda i: (i, 0, 0)),
            compiler_params=pltpu.CompilerParams(dimension_semantics=("parallel",)),
        )
        _GN_CACHE[key] = jax.jit(fn)
    y = _GN_CACHE[key](x.reshape(N, HW, C), mt,
                       aff["gamma"].reshape(1, C), aff["beta"].reshape(1, C))
    return y.reshape(N, H, W, C)


# --------------------------------------------------------------------------------------
# LayerNorm kernel (row-tiled, per-channel affine)
# --------------------------------------------------------------------------------------

def _layer_norm_kernel(x_ref, g_ref, b_ref, o_ref, *, eps):
    x = x_ref[...].astype(jnp.float32)
    mu = jnp.mean(x, axis=-1, keepdims=True)
    xc = x - mu
    var = jnp.mean(xc * xc, axis=-1, keepdims=True)          # biased (torch)
    y = xc * jax.lax.rsqrt(var + eps) * g_ref[...] + b_ref[...]
    o_ref[...] = y.astype(o_ref.dtype)


_LN_CACHE = {}


def layer_norm(x, aff, eps=1e-5):
    N, S, C = x.shape
    R = N * S
    rows = x.reshape(R, C)
    Rb = 8 if R <= 64 else 64                                # row tile ("parallel")
    Rp = _round_up(R, Rb)
    if Rp != R:
        rows = jnp.pad(rows, ((0, Rp - R), (0, 0)))
    key = (Rp, Rb, C, rows.dtype, float(eps))
    if key not in _LN_CACHE:
        fn = pl.pallas_call(
            functools.partial(_layer_norm_kernel, eps=float(eps)),
            out_shape=jax.ShapeDtypeStruct((Rp, C), BF16),
            grid=(Rp // Rb,),
            in_specs=[pl.BlockSpec((Rb, C), lambda i: (i, 0)),
                      pl.BlockSpec((1, C), lambda i: (0, 0)),
                      pl.BlockSpec((1, C), lambda i: (0, 0))],
            out_specs=pl.BlockSpec((Rb, C), lambda i: (i, 0)),
            compiler_params=pltpu.CompilerParams(dimension_semantics=("parallel",)),
        )
        _LN_CACHE[key] = jax.jit(fn)
    y = _LN_CACHE[key](rows, aff["gamma"].reshape(1, C), aff["beta"].reshape(1, C))
    if Rp != R:
        y = y[:R]
    return y.reshape(N, S, C)


# --------------------------------------------------------------------------------------
# Attention kernel (multiple heads per grid step, fused QK^T -> softmax -> PV)
# --------------------------------------------------------------------------------------

def _attention_kernel(q_ref, k_ref, v_ref, o_ref, *, scale):
    # TODO(synk): switch to online-softmax (flash) K-tiling before scaling S beyond ~1k.
    q = q_ref[...]                                           # (Hb, S, d) bf16
    k = k_ref[...]                                           # (Hb, L, d) bf16
    v = v_ref[...]                                           # (Hb, L, d) bf16
    s = jnp.einsum("bqd,bkd->bqk", q, k, preferred_element_type=jnp.float32) * scale
    m = jnp.max(s, axis=-1, keepdims=True)
    p = jnp.exp(s - m)
    p = p / jnp.sum(p, axis=-1, keepdims=True)
    o = jnp.einsum("bqk,bkd->bqd", p.astype(v.dtype), v, preferred_element_type=jnp.float32)
    o_ref[...] = o.astype(o_ref.dtype)


_ATTN_CACHE = {}


def multihead_attention(q, k, v, n_heads):
    """q: (N, S, C), k/v: (N, L, C) -> (N, S, C); per-head softmax(q k^T / sqrt(d)) v."""
    N, S, C = q.shape
    L = k.shape[1]
    d = C // n_heads

    def split_heads(t, T):
        return (t.reshape(N, T, n_heads, d).transpose(0, 2, 1, 3)
                 .reshape(N * n_heads, T, d).astype(BF16))

    qh, kh, vh = split_heads(q, S), split_heads(k, L), split_heads(v, L)
    NH = N * n_heads
    Hb = NH // 2 if NH % 2 == 0 else NH                       # >=2 steps -> megacore
    key = (NH, Hb, S, L, d)
    if key not in _ATTN_CACHE:
        fn = pl.pallas_call(
            functools.partial(_attention_kernel, scale=1.0 / math.sqrt(d)),
            out_shape=jax.ShapeDtypeStruct((NH, S, d), BF16),
            grid=(NH // Hb,),
            in_specs=[
                pl.BlockSpec((Hb, S, d), lambda i: (i, 0, 0)),
                pl.BlockSpec((Hb, L, d), lambda i: (i, 0, 0)),
                pl.BlockSpec((Hb, L, d), lambda i: (i, 0, 0)),
            ],
            out_specs=pl.BlockSpec((Hb, S, d), lambda i: (i, 0, 0)),
            compiler_params=pltpu.CompilerParams(dimension_semantics=("parallel",)),
        )
        _ATTN_CACHE[key] = jax.jit(fn)
    out = _ATTN_CACHE[key](qh, kh, vh)
    return out.reshape(N, n_heads, S, d).transpose(0, 2, 1, 3).reshape(N, S, C)


# --------------------------------------------------------------------------------------
# Deterministic parameter initialization (synthetic weights, bf16 storage)
# --------------------------------------------------------------------------------------

_BASE_KEY = jax.random.PRNGKey(0)
_PARAM_IDX = [0]


def _next_key():
    _PARAM_IDX[0] += 1
    return jax.random.fold_in(_BASE_KEY, _PARAM_IDX[0])


def _pad_weight(w2d, b1d):
    K, Nc = w2d.shape
    Kp, Np = _round_up(K, 128), _round_up(Nc, 128)
    wp = jnp.pad(w2d, ((0, Kp - K), (0, Np - Nc))).astype(BF16)
    bp = jnp.pad(b1d.astype(F32), (0, Np - Nc)).reshape(1, Np)
    return wp, bp


def make_linear(in_f, out_f, bias=True):
    w = jax.random.normal(_next_key(), (in_f, out_f), BF16) * (1.0 / math.sqrt(in_f))
    if bias:
        b = jax.random.normal(_next_key(), (out_f,), F32) * (1.0 / math.sqrt(in_f))
    else:
        b = jnp.zeros((out_f,), F32)
    wp, bp = _pad_weight(w, b)
    return dict(w=wp, b=bp, n_out=out_f)


def linear(p, x2d):
    return matmul(x2d, p["w"], p["b"], p["n_out"])


def make_conv(cin, cout, ksize):
    fan_in = cin * ksize * ksize
    # stored directly in (kh, kw, cin, cout) matmul layout (matches im2col column order)
    w = jax.random.normal(_next_key(), (ksize, ksize, cin, cout), BF16) * (1.0 / math.sqrt(fan_in))
    b = jax.random.normal(_next_key(), (cout,), F32) * (1.0 / math.sqrt(fan_in))
    wp, bp = _pad_weight(w.reshape(ksize * ksize * cin, cout), b)
    return dict(w=wp, b=bp, n_out=cout, k=ksize)


def conv2d(x, p, stride=1):
    """x: NHWC.  1x1: plain matmul.  3x3 (pad=1): im2col (kh, kw, cin order) + matmul."""
    N, H, W, C = x.shape
    k = p["k"]
    if k == 1:
        out = matmul(x.reshape(N * H * W, C), p["w"], p["b"], p["n_out"])
        return out.reshape(N, H, W, p["n_out"])
    # TODO(synk): fuse im2col into the matmul K-grid (index_map over (dy,dx,C)) to avoid
    # materializing the 9x-wide patch matrix in HBM.
    xp = jnp.pad(x, ((0, 0), (1, 1), (1, 1), (0, 0)))
    Ho = (H + 2 - 3) // stride + 1
    Wo = (W + 2 - 3) // stride + 1
    cols = []
    for dy in range(3):
        for dx in range(3):
            cols.append(xp[:, dy:dy + stride * (Ho - 1) + 1:stride,
                            dx:dx + stride * (Wo - 1) + 1:stride, :])
    a = jnp.concatenate(cols, axis=-1).reshape(N * Ho * Wo, 9 * C)
    out = matmul(a, p["w"], p["b"], p["n_out"])
    return out.reshape(N, Ho, Wo, p["n_out"])


def make_affine(c):
    return dict(gamma=jnp.ones((c,), F32), beta=jnp.zeros((c,), F32))


# --------------------------------------------------------------------------------------
# Attention / residual / upsample blocks
# --------------------------------------------------------------------------------------

def make_self_attention(n_heads, d_embed):
    return dict(n_heads=n_heads,
                in_proj=make_linear(d_embed, 3 * d_embed, bias=False),
                out_proj=make_linear(d_embed, d_embed, bias=True))


def self_attention(p, x):
    N, S, C = x.shape
    qkv = linear(p["in_proj"], x.reshape(N * S, C)).reshape(N, S, 3 * C)
    q, k, v = jnp.split(qkv, 3, axis=-1)
    out = multihead_attention(q, k, v, p["n_heads"])
    return linear(p["out_proj"], out.reshape(N * S, C)).reshape(N, S, C)


def make_cross_attention(n_heads, d_embed, d_cross):
    return dict(n_heads=n_heads,
                q_proj=make_linear(d_embed, d_embed, bias=False),
                k_proj=make_linear(d_cross, d_embed, bias=False),
                v_proj=make_linear(d_cross, d_embed, bias=False),
                out_proj=make_linear(d_embed, d_embed, bias=True))


def cross_attention(p, x, ctx):
    N, S, C = x.shape
    L, Dc = ctx.shape[1], ctx.shape[2]
    q = linear(p["q_proj"], x.reshape(N * S, C)).reshape(N, S, C)
    k = linear(p["k_proj"], ctx.reshape(N * L, Dc)).reshape(N, L, C)
    v = linear(p["v_proj"], ctx.reshape(N * L, Dc)).reshape(N, L, C)
    out = multihead_attention(q, k, v, p["n_heads"])
    return linear(p["out_proj"], out.reshape(N * S, C)).reshape(N, S, C)


def make_attn_block(n_head, n_embd, d_context=768):
    ch = n_head * n_embd
    return dict(ch=ch,
                gn=make_affine(ch),
                conv_input=make_conv(ch, ch, 1),
                ln1=make_affine(ch), attn1=make_self_attention(n_head, ch),
                ln2=make_affine(ch), attn2=make_cross_attention(n_head, ch, d_context),
                ln3=make_affine(ch),
                geglu1=make_linear(ch, 4 * ch * 2, bias=True),
                geglu2=make_linear(4 * ch, ch, bias=True),
                conv_output=make_conv(ch, ch, 1))


def attention_block(p, x, context):
    residue_long = x
    x = group_norm(x, p["gn"], eps=1e-6, do_silu=False)
    x = conv2d(x, p["conv_input"])
    N, H, W, C = x.shape
    x = x.reshape(N, H * W, C)          # == NCHW .view(n, c, hw).transpose(-1, -2)

    res = x
    x = layer_norm(x, p["ln1"])
    x = self_attention(p["attn1"], x) + res

    res = x
    x = layer_norm(x, p["ln2"])
    x = cross_attention(p["attn2"], x, context) + res

    res = x
    x = layer_norm(x, p["ln3"])
    # TODO(synk): fuse the GEGLU gating (xg * gelu(gate)) into the geglu1 matmul epilogue.
    g = linear(p["geglu1"], x.reshape(N * H * W, C)).reshape(N, H * W, 8 * C)
    xg, gate = jnp.split(g, 2, axis=-1)
    x = (xg.astype(F32) * jax.nn.gelu(gate.astype(F32), approximate=False)).astype(BF16)
    x = linear(p["geglu2"], x.reshape(N * H * W, 4 * C)).reshape(N, H * W, C) + res

    x = x.reshape(N, H, W, C)
    return conv2d(x, p["conv_output"]) + residue_long


def make_res_block(cin, cout, n_time=1280):
    return dict(gn1=make_affine(cin),
                conv_feature=make_conv(cin, cout, 3),
                linear_time=make_linear(n_time, cout, bias=True),
                gn2=make_affine(cout),
                conv_merged=make_conv(cout, cout, 3),
                residual=None if cin == cout else make_conv(cin, cout, 1),
                cout=cout)


def residual_block(p, feature, time):
    residue = feature
    f = group_norm(feature, p["gn1"], eps=1e-5, do_silu=True)   # GN + SiLU fused
    f = conv2d(f, p["conv_feature"])
    t = linear(p["linear_time"], jax.nn.silu(time))             # (1, cout), bf16
    merged = f + t.reshape(1, 1, 1, p["cout"])
    merged = group_norm(merged, p["gn2"], eps=1e-5, do_silu=True)
    merged = conv2d(merged, p["conv_merged"])
    res = residue if p["residual"] is None else conv2d(residue, p["residual"])
    return merged + res


def make_upsample(ch):
    return dict(conv=make_conv(ch, ch, 3))


def upsample(p, x):
    # TODO(synk): fold the nearest-neighbor upsample into the conv im2col/index_map to
    # avoid materializing the 4x copy.
    x = jnp.repeat(jnp.repeat(x, 2, axis=1), 2, axis=2)          # nearest, scale 2
    return conv2d(x, p["conv"])


# --------------------------------------------------------------------------------------
# UNET
# --------------------------------------------------------------------------------------

def make_unet():
    enc = [
        [("conv", make_conv(4, 320, 3), 1)],
        [("res", make_res_block(320, 320)), ("attn", make_attn_block(8, 40))],
        [("res", make_res_block(320, 320)), ("attn", make_attn_block(8, 40))],
        [("conv", make_conv(320, 320, 3), 2)],
        [("res", make_res_block(320, 640)), ("attn", make_attn_block(8, 80))],
        [("res", make_res_block(640, 640)), ("attn", make_attn_block(8, 80))],
        [("conv", make_conv(640, 640, 3), 2)],
        [("res", make_res_block(640, 1280)), ("attn", make_attn_block(8, 160))],
        [("res", make_res_block(1280, 1280)), ("attn", make_attn_block(8, 160))],
        [("conv", make_conv(1280, 1280, 3), 2)],
        [("res", make_res_block(1280, 1280))],
        [("res", make_res_block(1280, 1280))],
    ]
    bottleneck = [("res", make_res_block(1280, 1280)),
                  ("attn", make_attn_block(8, 160)),
                  ("res", make_res_block(1280, 1280))]
    dec = [
        [("res", make_res_block(2560, 1280))],
        [("res", make_res_block(2560, 1280))],
        [("res", make_res_block(2560, 1280)), ("up", make_upsample(1280))],
        [("res", make_res_block(2560, 1280)), ("attn", make_attn_block(8, 160))],
        [("res", make_res_block(2560, 1280)), ("attn", make_attn_block(8, 160))],
        [("res", make_res_block(1920, 1280)), ("attn", make_attn_block(8, 160)), ("up", make_upsample(1280))],
        [("res", make_res_block(1920, 640)), ("attn", make_attn_block(8, 80))],
        [("res", make_res_block(1280, 640)), ("attn", make_attn_block(8, 80))],
        [("res", make_res_block(960, 640)), ("attn", make_attn_block(8, 80)), ("up", make_upsample(640))],
        [("res", make_res_block(960, 320)), ("attn", make_attn_block(8, 40))],
        [("res", make_res_block(640, 320)), ("attn", make_attn_block(8, 40))],
        [("res", make_res_block(640, 320)), ("attn", make_attn_block(8, 40))],
    ]
    return dict(enc=enc, bottleneck=bottleneck, dec=dec)


def run_switch(layers, x, context, time):
    for entry in layers:
        kind, p = entry[0], entry[1]
        if kind == "res":
            x = residual_block(p, x, time)
        elif kind == "attn":
            x = attention_block(p, x, context)
        elif kind == "conv":
            x = conv2d(x, p, stride=entry[2])
        elif kind == "up":
            x = upsample(p, x)
    return x


def unet_forward(params, x_nchw, context, time):
    x = jnp.transpose(x_nchw, (0, 2, 3, 1)).astype(BF16)     # NCHW -> NHWC, bf16
    context = context.astype(BF16)
    skips = []
    for layers in params["enc"]:
        x = run_switch(layers, x, context, time)
        skips.append(x)
    x = run_switch(params["bottleneck"], x, context, time)
    for layers in params["dec"]:
        x = jnp.concatenate([x, skips.pop()], axis=-1)       # channel concat (== dim=1 NCHW)
        x = run_switch(layers, x, context, time)
    return jnp.transpose(x, (0, 3, 1, 2)).astype(F32)        # NHWC -> NCHW


# --------------------------------------------------------------------------------------
# Main
# --------------------------------------------------------------------------------------

if __name__ == "__main__":
    key = jax.random.PRNGKey(0)
    kx, kc, kt = jax.random.split(jax.random.fold_in(key, 987), 3)
    # Spatial must be a multiple of 8 so the decoder upsample path matches the encoder
    # skip connections (3 stride-2 downsamples).
    x = jax.random.normal(kx, (1, 4, 16, 16), F32)        # latent, NCHW
    context = jax.random.normal(kc, (1, 8, 768), F32)     # text context
    time = jax.random.normal(kt, (1, 1280), F32)          # time embedding

    params = make_unet()
    out = unet_forward(params, x, context, time)
    out = jax.block_until_ready(out)

    assert out.shape == (1, 320, 16, 16), out.shape
    assert bool(jnp.all(jnp.isfinite(out)))
    print("KERNEL_OK")
</pallas_src>

<mosaic_0001>
module attributes {stable_mosaic.version = 11 : i64} {
  func.func @_matmul_bias_kernel(%arg0: i32, %arg1: i32, %arg2: memref<256x128xbf16, #tpu.memory_space<vmem>>, %arg3: memref<128x384xbf16, #tpu.memory_space<vmem>>, %arg4: memref<1x384xf32, #tpu.memory_space<vmem>>, %arg5: memref<256x384xbf16, #tpu.memory_space<vmem>>, %arg6: memref<256x384xf32, #tpu.memory_space<vmem>>) attributes {dimension_semantics = [#tpu.dimension_semantics<parallel>, #tpu.dimension_semantics<arbitrary>], iteration_bounds = array<i64: 1, 1>, scalar_prefetch = 0 : i64, scratch_operands = 1 : i64, tpu.core_type = #tpu.core_type<tc>, window_params = [{transform_indices = @transform_0, window_bounds = array<i64: 256, 128>}, {transform_indices = @transform_1, window_bounds = array<i64: 128, 384>}, {transform_indices = @transform_2, window_bounds = array<i64: 1, 384>}, {transform_indices = @transform_3, window_bounds = array<i64: 256, 384>}]} {
    %c0_i32 = arith.constant 0 : i32
    %0 = arith.cmpi eq, %arg1, %c0_i32 : i32
    %1 = arith.extui %0 : i1 to i32
    %c0_i32_0 = arith.constant 0 : i32
    %2 = arith.cmpi ne, %1, %c0_i32_0 : i32
    scf.if %2 {
      %cst_10 = arith.constant 0.000000e+00 : f32
      %12 = vector.broadcast %cst_10 : f32 to vector<256x384xf32>
      %c0_11 = arith.constant 0 : index
      %c0_12 = arith.constant 0 : index
      %13 = vector.load %arg6[%c0_11, %c0_12] : memref<256x384xf32, #tpu.memory_space<vmem>>, vector<256x384xf32>
      tpu.vector_store %arg6[%c0_11, %c0_12], %12 {strides = array<i32>} : memref<256x384xf32, #tpu.memory_space<vmem>>, vector<256x384xf32>,
    } else {
    }
    %c0 = arith.constant 0 : index
    %c0_1 = arith.constant 0 : index
    %3 = vector.load %arg6[%c0, %c0_1] : memref<256x384xf32, #tpu.memory_space<vmem>>, vector<256x384xf32>
    %c0_2 = arith.constant 0 : index
    %c0_3 = arith.constant 0 : index
    %4 = vector.load %arg2[%c0_2, %c0_3] : memref<256x128xbf16, #tpu.memory_space<vmem>>, vector<256x128xbf16>
    %c0_4 = arith.constant 0 : index
    %c0_5 = arith.constant 0 : index
    %5 = vector.load %arg3[%c0_4, %c0_5] : memref<128x384xbf16, #tpu.memory_space<vmem>>, vector<128x384xbf16>
    %cst = arith.constant dense<0.000000e+00> : vector<256x384xf32>
    %6 = tpu.matmul %4, %5, %cst {dimension_numbers = #tpu.dot_dimension_numbers<[1], [0], [0], [1], [0, 0, 1, 1], [], []>} : vector<256x128xbf16>, vector<128x384xbf16>, vector<256x384xf32> -> vector<256x384xf32>
    %7 = arith.addf %3, %6 : vector<256x384xf32>
    %c0_6 = arith.constant 0 : index
    %c0_7 = arith.constant 0 : index
    %8 = vector.load %arg6[%c0_6, %c0_7] : memref<256x384xf32, #tpu.memory_space<vmem>>, vector<256x384xf32>
    tpu.vector_store %arg6[%c0_6, %c0_7], %7 {strides = array<i32>} : memref<256x384xf32, #tpu.memory_space<vmem>>, vector<256x384xf32>,
    %c0_i32_8 = arith.constant 0 : i32
    %9 = arith.cmpi eq, %arg1, %c0_i32_8 : i32
    %10 = arith.extui %9 : i1 to i32
    %c0_i32_9 = arith.constant 0 : i32
    %11 = arith.cmpi ne, %10, %c0_i32_9 : i32
    scf.if %11 {
      %c0_10 = arith.constant 0 : index
      %c0_11 = arith.constant 0 : index
      %12 = vector.load %arg6[%c0_10, %c0_11] : memref<256x384xf32, #tpu.memory_space<vmem>>, vector<256x384xf32>
      %c0_12 = arith.constant 0 : index
      %c0_13 = arith.constant 0 : index
      %13 = vector.load %arg4[%c0_12, %c0_13] : memref<1x384xf32, #tpu.memory_space<vmem>>, vector<1x384xf32>
      %14 = vector.broadcast %13 : vector<1x384xf32> to vector<256x384xf32>
      %15 = arith.addf %12, %14 : vector<256x384xf32>
      %16 = arith.truncf %15 : vector<256x384xf32> to vector<256x384xbf16>
      %c0_14 = arith.constant 0 : index
      %c0_15 = arith.constant 0 : index
      %17 = vector.load %arg5[%c0_14, %c0_15] : memref<256x384xbf16, #tpu.memory_space<vmem>>, vector<256x384xbf16>
      tpu.vector_store %arg5[%c0_14, %c0_15], %16 {strides = array<i32>} : memref<256x384xbf16, #tpu.memory_space<vmem>>, vector<256x384xbf16>,
    } else {
    }
    return
  }
  func.func @transform_0(%arg0: i32, %arg1: i32) -> (i32, i32) {
    %c0_i32 = arith.constant 0 : i32
    %c0_i32_0 = arith.constant 0 : i32
    return %c0_i32, %arg1 : i32, i32
  }
  func.func @transform_1(%arg0: i32, %arg1: i32) -> (i32, i32) {
    %c0_i32 = arith.constant 0 : i32
    return %arg1, %arg0 : i32, i32
  }
  func.func @transform_2(%arg0: i32, %arg1: i32) -> (i32, i32) {
    %c0_i32 = arith.constant 0 : i32
    %c0_i32_0 = arith.constant 0 : i32
    return %c0_i32, %arg0 : i32, i32
  }
  func.func @transform_3(%arg0: i32, %arg1: i32) -> (i32, i32) {
    %c0_i32 = arith.constant 0 : i32
    %c0_i32_0 = arith.constant 0 : i32
    return %c0_i32, %arg0 : i32, i32
  }
}

</mosaic_0001>

<llo_original>
// kernel: tpu_custom_call.1
$region0: #{tpu_custom_call.1}
  #allocation0 [shape = 'u32[]', space=smem, size = 0x4, offset = 0x4, fixed_abs, tag = 'smem constant byte address 0x4 - core index']
  #allocation1 [shape = 'u32[72,128]{1,0:T(1,128)}', space=vmem, size = 0x9000, scoped, tag = 'internal scratch']
  #allocation2 [shape = 'f32[256,384]{1,0:T(8,128)}', space=vmem, size = 0x60000, scoped, tag = 'scratch operand']
  %s0 = inlined_call_operand.hbm [shape: bf16[256,128], index: 0, kind: input, shape index: {}]
  %s1 = inlined_call_operand.hbm [shape: bf16[128,384], index: 1, kind: input, shape index: {}]
  %s2 = inlined_call_operand.hbm [shape: f32[1,384], index: 2, kind: input, shape index: {}]
  %s3 = inlined_call_operand.hbm [shape: bf16[256,384], index: 3, kind: output, shape index: {}]
  %s4 = sld [smem:[#allocation0]]
  $region42: #{tpu_custom_call.1} parent=0
    _
  %s6 = ssub.s32 1, %s4
  %s7 = scalar_select 0, %s6, %s4
  $region1: #{tpu_custom_call.1} parent=0
    #allocation3 [shape = 'u8[65536]{0}', space=vmem, size = 0x10000, scoped, tag = 'input window, operand 0, single buffered']
    #allocation4 [shape = 's32[1]{0}', space=sflag, size = 0x4, scoped, tag = 'scoped memory for tpu_custom_call.1']
    #allocation5 [shape = 's32[1]{0}', space=sflag, size = 0x4, scoped, tag = 'scoped memory for tpu_custom_call.1']
    #allocation6 [shape = 'u8[98304]{0}', space=vmem, size = 0x18000, scoped, tag = 'input window, operand 1, single buffered']
    #allocation7 [shape = 's32[1]{0}', space=sflag, size = 0x4, scoped, tag = 'scoped memory for tpu_custom_call.1']
    #allocation8 [shape = 'u8[1536]{0}', space=vmem, size = 0x800, scoped, tag = 'input window, operand 2, single buffered']
    #allocation9 [shape = 'u8[196608]{0}', space=vmem, size = 0x30000, scoped, tag = 'output window, operand 0, single buffered']
    %8 = vsyncpa [#allocation4], 0
    %9 = vsyncpa [#allocation7], 0
    %10 = vsyncpa [#allocation5], 0
    // Predicated region
    $region2: #{tpu_custom_call.1} parent=1 // pred_check
      _
    $region3: #{tpu_custom_call.1} parent=1 // pred_check_branch
      %12 = sbr.rel (0) target = $region5
    $region4: #{tpu_custom_call.1} parent=1 // pred_region
      %14 = vsyncadd [#allocation4], 0
      %s15 = sshll.u32 %s0, 4
      %s16 = int_to_ptr.hbm [resolvable:$true] %s15
      %s17 = sshll.u32 [#allocation3], 4
      %s18 = int_to_ptr.vmem [resolvable:$true] %s17
      %23 = dma.hbm_to_vmem [thread:$0]  %s16, 2048, %s18, [#allocation4], 64, 64, 4
    $region5: #{tpu_custom_call.1} parent=1 // pred_fallthru
      _
    // Predicated region
    $region6: #{tpu_custom_call.1} parent=1 // pred_check
      _
    $region7: #{tpu_custom_call.1} parent=1 // pred_check_branch
      %25 = sbr.rel (0) target = $region9
    $region8: #{tpu_custom_call.1} parent=1 // pred_region
      %27 = vsyncadd [#allocation7], 0
      %s28 = sshll.u32 %s1, 4
      %s29 = int_to_ptr.hbm [resolvable:$true] %s28
      %s30 = sshll.u32 [#allocation6], 4
      %s31 = int_to_ptr.vmem [resolvable:$true] %s30
      %36 = dma.hbm_to_vmem [thread:$0]  %s29, 3072, %s31, [#allocation7], 192, 192, 12
    $region9: #{tpu_custom_call.1} parent=1 // pred_fallthru
      _
    // Predicated region
    $region10: #{tpu_custom_call.1} parent=1 // pred_check
      _
    $region11: #{tpu_custom_call.1} parent=1 // pred_check_branch
      %38 = sbr.rel (0) target = $region13
    $region12: #{tpu_custom_call.1} parent=1 // pred_region
      %40 = vsyncadd [#allocation7], 0
      %s42 = sshll.u32 %s2, 4
      %s43 = int_to_ptr.hbm [resolvable:$true] %s42
      %s44 = sshll.u32 [#allocation8], 4
      %s45 = int_to_ptr.vmem [resolvable:$true] %s44
      %47 = dma.hbm_to_vmem [thread:$0]  %s43, 48, %s45, [#allocation7]
    $region13: #{tpu_custom_call.1} parent=1 // pred_fallthru
      _
    // Predicated region
    $region14: #{tpu_custom_call.1} parent=1 // pred_check
      _
    $region15: #{tpu_custom_call.1} parent=1 // pred_check_branch
      %49 = sbr.rel (0) target = $region17
    $region16: #{tpu_custom_call.1} parent=1 // pred_region
      %51 = dma.done [#allocation4], 2048
    $region17: #{tpu_custom_call.1} parent=1 // pred_fallthru
      _
    // Predicated region
    $region18: #{tpu_custom_call.1} parent=1 // pred_check
      _
    $region19: #{tpu_custom_call.1} parent=1 // pred_check_branch
      %53 = sbr.rel (0) target = $region21
    $region20: #{tpu_custom_call.1} parent=1 // pred_region
      %55 = dma.done [#allocation7], 3072
    $region21: #{tpu_custom_call.1} parent=1 // pred_fallthru
      _
    // Predicated region
    $region22: #{tpu_custom_call.1} parent=1 // pred_check
      _
    $region23: #{tpu_custom_call.1} parent=1 // pred_check_branch
      %57 = sbr.rel (0) target = $region25
    $region24: #{tpu_custom_call.1} parent=1 // pred_region
      %59 = dma.done [#allocation7], 48
    $region25: #{tpu_custom_call.1} parent=1 // pred_fallthru
      _
    %p60 = scmp.eq.s32.totalorder 0, 0
    // Predicated region
    $region26: #{tpu_custom_call.1} parent=1 // pred_check
      %p61 = pneg %p60
    $region27: #{tpu_custom_call.1} parent=1 // pred_check_branch
      %63 = sbr.rel (%p61) target = $region29
    $region28: #{tpu_custom_call.1} parent=1 // pred_region
      %64 = vst [vmem:[#allocation2] sm:$0xff] 0.0
      %65 = vst [vmem:[#allocation2 + $0x8] sm:$0xff] 0.0
      %66 = vst [vmem:[#allocation2 + $0x10] sm:$0xff] 0.0
      %67 = vst [vmem:[#allocation2 + $0x18] sm:$0xff] 0.0
      %68 = vst [vmem:[#allocation2 + $0x20] sm:$0xff] 0.0
      %69 = vst [vmem:[#allocation2 + $0x28] sm:$0xff] 0.0
      %70 = vst [vmem:[#allocation2 + $0x30] sm:$0xff] 0.0
      %71 = vst [vmem:[#allocation2 + $0x38] sm:$0xff] 0.0
      %72 = vst [vmem:[#allocation2 + $0x40] sm:$0xff] 0.0
      %73 = vst [vmem:[#allocation2 + $0x48] sm:$0xff] 0.0
      %74 = vst [vmem:[#allocation2 + $0x50] sm:$0xff] 0.0
      %75 = vst [vmem:[#allocation2 + $0x58] sm:$0xff] 0.0
      %76 = vst [vmem:[#allocation2 + $0x60] sm:$0xff] 0.0
      %77 = vst [vmem:[#allocation2 + $0x68] sm:$0xff] 0.0
      %78 = vst [vmem:[#allocation2 + $0x70] sm:$0xff] 0.0
      %79 = vst [vmem:[#allocation2 + $0x78] sm:$0xff] 0.0
      %80 = vst [vmem:[#allocation2 + $0x80] sm:$0xff] 0.0
      %81 = vst [vmem:[#allocation2 + $0x88] sm:$0xff] 0.0
      %82 = vst [vmem:[#allocation2 + $0x90] sm:$0xff] 0.0
      %83 = vst [vmem:[#allocation2 + $0x98] sm:$0xff] 0.0
      %84 = vst [vmem:[#allocation2 + $0xa0] sm:$0xff] 0.0
      %85 = vst [vmem:[#allocation2 + $0xa8] sm:$0xff] 0.0
      %86 = vst [vmem:[#allocation2 + $0xb0] sm:$0xff] 0.0
      %87 = vst [vmem:[#allocation2 + $0xb8] sm:$0xff] 0.0
      %88 = vst [vmem:[#allocation2 + $0xc0] sm:$0xff] 0.0
      %89 = vst [vmem:[#allocation2 + $0xc8] sm:$0xff] 0.0
      %90 = vst [vmem:[#allocation2 + $0xd0] sm:$0xff] 0.0
      %91 = vst [vmem:[#allocation2 + $0xd8] sm:$0xff] 0.0
      %92 = vst [vmem:[#allocation2 + $0xe0] sm:$0xff] 0.0
      %93 = vst [vmem:[#allocation2 + $0xe8] sm:$0xff] 0.0
      %94 = vst [vmem:[#allocation2 + $0xf0] sm:$0xff] 0.0
      %95 = vst [vmem:[#allocation2 + $0xf8] sm:$0xff] 0.0
      %96 = vst [vmem:[#allocation2 + $0x100] sm:$0xff] 0.0
      %97 = vst [vmem:[#allocation2 + $0x108] sm:$0xff] 0.0
      %98 = vst [vmem:[#allocation2 + $0x110] sm:$0xff] 0.0
      %99 = vst [vmem:[#allocation2 + $0x118] sm:$0xff] 0.0
      %100 = vst [vmem:[#allocation2 + $0x120] sm:$0xff] 0.0
      %101 = vst [vmem:[#allocation2 + $0x128] sm:$0xff] 0.0
      %102 = vst [vmem:[#allocation2 + $0x130] sm:$0xff] 0.0
      %103 = vst [vmem:[#allocation2 + $0x138] sm:$0xff] 0.0
      %104 = vst [vmem:[#allocation2 + $0x140] sm:$0xff] 0.0
      %105 = vst [vmem:[#allocation2 + $0x148] sm:$0xff] 0.0
      %106 = vst [vmem:[#allocation2 + $0x150] sm:$0xff] 0.0
      %107 = vst [vmem:[#allocation2 + $0x158] sm:$0xff] 0.0
      %108 = vst [vmem:[#allocation2 + $0x160] sm:$0xff] 0.0
      %109 = vst [vmem:[#allocation2 + $0x168] sm:$0xff] 0.0
      %110 = vst [vmem:[#allocation2 + $0x170] sm:$0xff] 0.0
      %111 = vst [vmem:[#allocation2 + $0x178] sm:$0xff] 0.0
      %112 = vst [vmem:[#allocation2 + $0x180] sm:$0xff] 0.0
      %113 = vst [vmem:[#allocation2 + $0x188] sm:$0xff] 0.0
      %114 = vst [vmem:[#allocation2 + $0x190] sm:$0xff] 0.0
      %115 = vst [vmem:[#allocation2 + $0x198] sm:$0xff] 0.0
      %116 = vst [vmem:[#allocation2 + $0x1a0] sm:$0xff] 0.0
      %117 = vst [vmem:[#allocation2 + $0x1a8] sm:$0xff] 0.0
      %118 = vst [vmem:[#allocation2 + $0x1b0] sm:$0xff] 0.0
      %119 = vst [vmem:[#allocation2 + $0x1b8] sm:$0xff] 0.0
      %120 = vst [vmem:[#allocation2 + $0x1c0] sm:$0xff] 0.0
      %121 = vst [vmem:[#allocation2 + $0x1c8] sm:$0xff] 0.0
      %122 = vst [vmem:[#allocation2 + $0x1d0] sm:$0xff] 0.0
      %123 = vst [vmem:[#allocation2 + $0x1d8] sm:$0xff] 0.0
      %124 = vst [vmem:[#allocation2 + $0x1e0] sm:$0xff] 0.0
      %125 = vst [vmem:[#allocation2 + $0x1e8] sm:$0xff] 0.0
      %126 = vst [vmem:[#allocation2 + $0x1f0] sm:$0xff] 0.0
      %127 = vst [vmem:[#allocation2 + $0x1f8] sm:$0xff] 0.0
      %128 = vst [vmem:[#allocation2 + $0x200] sm:$0xff] 0.0
      %129 = vst [vmem:[#allocation2 + $0x208] sm:$0xff] 0.0
      %130 = vst [vmem:[#allocation2 + $0x210] sm:$0xff] 0.0
      %131 = vst [vmem:[#allocation2 + $0x218] sm:$0xff] 0.0
      %132 = vst [vmem:[#allocation2 + $0x220] sm:$0xff] 0.0
      %133 = vst [vmem:[#allocation2 + $0x228] sm:$0xff] 0.0
      %134 = vst [vmem:[#allocation2 + $0x230] sm:$0xff] 0.0
      %135 = vst [vmem:[#allocation2 + $0x238] sm:$0xff] 0.0
      %136 = vst [vmem:[#allocation2 + $0x240] sm:$0xff] 0.0
      %137 = vst [vmem:[#allocation2 + $0x248] sm:$0xff] 0.0
      %138 = vst [vmem:[#allocation2 + $0x250] sm:$0xff] 0.0
      %139 = vst [vmem:[#allocation2 + $0x258] sm:$0xff] 0.0
      %140 = vst [vmem:[#allocation2 + $0x260] sm:$0xff] 0.0
      %141 = vst [vmem:[#allocation2 + $0x268] sm:$0xff] 0.0
      %142 = vst [vmem:[#allocation2 + $0x270] sm:$0xff] 0.0
      %143 = vst [vmem:[#allocation2 + $0x278] sm:$0xff] 0.0
      %144 = vst [vmem:[#allocation2 + $0x280] sm:$0xff] 0.0
      %145 = vst [vmem:[#allocation2 + $0x288] sm:$0xff] 0.0
      %146 = vst [vmem:[#allocation2 + $0x290] sm:$0xff] 0.0
      %147 = vst [vmem:[#allocation2 + $0x298] sm:$0xff] 0.0
      %148 = vst [vmem:[#allocation2 + $0x2a0] sm:$0xff] 0.0
      %149 = vst [vmem:[#allocation2 + $0x2a8] sm:$0xff] 0.0
      %150 = vst [vmem:[#allocation2 + $0x2b0] sm:$0xff] 0.0
      %151 = vst [vmem:[#allocation2 + $0x2b8] sm:$0xff] 0.0
      %152 = vst [vmem:[#allocation2 + $0x2c0] sm:$0xff] 0.0
      %153 = vst [vmem:[#allocation2 + $0x2c8] sm:$0xff] 0.0
      %154 = vst [vmem:[#allocation2 + $0x2d0] sm:$0xff] 0.0
      %155 = vst [vmem:[#allocation2 + $0x2d8] sm:$0xff] 0.0
      %156 = vst [vmem:[#allocation2 + $0x2e0] sm:$0xff] 0.0
      %157 = vst [vmem:[#allocation2 + $0x2e8] sm:$0xff] 0.0
      %158 = vst [vmem:[#allocation2 + $0x2f0] sm:$0xff] 0.0
      %159 = vst [vmem:[#allocation2 + $0x2f8] sm:$0xff] 0.0
    $region29: #{tpu_custom_call.1} parent=1 // pred_fallthru
      _
    %v160 = vld [vmem:[#allocation2] sm:$0xff]
    %v161 = vld [vmem:[#allocation2 + $0x8] sm:$0xff]
    %v162 = vld [vmem:[#allocation2 + $0x10] sm:$0xff]
    %v163 = vld [vmem:[#allocation2 + $0x18] sm:$0xff]
    %v164 = vld [vmem:[#allocation2 + $0x20] sm:$0xff]
    %v165 = vld [vmem:[#allocation2 + $0x28] sm:$0xff]
    %v166 = vld [vmem:[#allocation2 + $0x30] sm:$0xff]
    %v167 = vld [vmem:[#allocation2 + $0x38] sm:$0xff]
    %v168 = vld [vmem:[#allocation2 + $0x40] sm:$0xff]
    %v169 = vld [vmem:[#allocation2 + $0x48] sm:$0xff]
    %v170 = vld [vmem:[#allocation2 + $0x50] sm:$0xff]
    %v171 = vld [vmem:[#allocation2 + $0x58] sm:$0xff]
    %v172 = vld [vmem:[#allocation2 + $0x60] sm:$0xff]
    %v173 = vld [vmem:[#allocation2 + $0x68] sm:$0xff]
    %v174 = vld [vmem:[#allocation2 + $0x70] sm:$0xff]
    %v175 = vld [vmem:[#allocation2 + $0x78] sm:$0xff]
    %v176 = vld [vmem:[#allocation2 + $0x80] sm:$0xff]
    %v177 = vld [vmem:[#allocation2 + $0x88] sm:$0xff]
    %v178 = vld [vmem:[#allocation2 + $0x90] sm:$0xff]
    %v179 = vld [vmem:[#allocation2 + $0x98] sm:$0xff]
    %v180 = vld [vmem:[#allocation2 + $0xa0] sm:$0xff]
    %v181 = vld [vmem:[#allocation2 + $0xa8] sm:$0xff]
    %v182 = vld [vmem:[#allocation2 + $0xb0] sm:$0xff]
    %v183 = vld [vmem:[#allocation2 + $0xb8] sm:$0xff]
    %v184 = vld [vmem:[#allocation2 + $0xc0] sm:$0xff]
    %v185 = vld [vmem:[#allocation2 + $0xc8] sm:$0xff]
    %v186 = vld [vmem:[#allocation2 + $0xd0] sm:$0xff]
    %v187 = vld [vmem:[#allocation2 + $0xd8] sm:$0xff]
    %v188 = vld [vmem:[#allocation2 + $0xe0] sm:$0xff]
    %v189 = vld [vmem:[#allocation2 + $0xe8] sm:$0xff]
    %v190 = vld [vmem:[#allocation2 + $0xf0] sm:$0xff]
    %v191 = vld [vmem:[#allocation2 + $0xf8] sm:$0xff]
    %v192 = vld [vmem:[#allocation2 + $0x100] sm:$0xff]
    %v193 = vld [vmem:[#allocation2 + $0x108] sm:$0xff]
    %v194 = vld [vmem:[#allocation2 + $0x110] sm:$0xff]
    %v195 = vld [vmem:[#allocation2 + $0x118] sm:$0xff]
    %v196 = vld [vmem:[#allocation2 + $0x120] sm:$0xff]
    %v197 = vld [vmem:[#allocation2 + $0x128] sm:$0xff]
    %v198 = vld [vmem:[#allocation2 + $0x130] sm:$0xff]
    %v199 = vld [vmem:[#allocation2 + $0x138] sm:$0xff]
    %v200 = vld [vmem:[#allocation2 + $0x140] sm:$0xff]
    %v201 = vld [vmem:[#allocation2 + $0x148] sm:$0xff]
    %v202 = vld [vmem:[#allocation2 + $0x150] sm:$0xff]
    %v203 = vld [vmem:[#allocation2 + $0x158] sm:$0xff]
    %v204 = vld [vmem:[#allocation2 + $0x160] sm:$0xff]
    %v205 = vld [vmem:[#allocation2 + $0x168] sm:$0xff]
    %v206 = vld [vmem:[#allocation2 + $0x170] sm:$0xff]
    %v207 = vld [vmem:[#allocation2 + $0x178] sm:$0xff]
    %v208 = vld [vmem:[#allocation2 + $0x180] sm:$0xff]
    %v209 = vld [vmem:[#allocation2 + $0x188] sm:$0xff]
    %v210 = vld [vmem:[#allocation2 + $0x190] sm:$0xff]
    %v211 = vld [vmem:[#allocation2 + $0x198] sm:$0xff]
    %v212 = vld [vmem:[#allocation2 + $0x1a0] sm:$0xff]
    %v213 = vld [vmem:[#allocation2 + $0x1a8] sm:$0xff]
    %v214 = vld [vmem:[#allocation2 + $0x1b0] sm:$0xff]
    %v215 = vld [vmem:[#allocation2 + $0x1b8] sm:$0xff]
    %v216 = vld [vmem:[#allocation2 + $0x1c0] sm:$0xff]
    %v217 = vld [vmem:[#allocation2 + $0x1c8] sm:$0xff]
    %v218 = vld [vmem:[#allocation2 + $0x1d0] sm:$0xff]
    %v219 = vld [vmem:[#allocation2 + $0x1d8] sm:$0xff]
    %v220 = vld [vmem:[#allocation2 + $0x1e0] sm:$0xff]
    %v221 = vld [vmem:[#allocation2 + $0x1e8] sm:$0xff]
    %v222 = vld [vmem:[#allocation2 + $0x1f0] sm:$0xff]
    %v223 = vld [vmem:[#allocation2 + $0x1f8] sm:$0xff]
    %v224 = vld [vmem:[#allocation2 + $0x200] sm:$0xff]
    %v225 = vld [vmem:[#allocation2 + $0x208] sm:$0xff]
    %v226 = vld [vmem:[#allocation2 + $0x210] sm:$0xff]
    %v227 = vld [vmem:[#allocation2 + $0x218] sm:$0xff]
    %v228 = vld [vmem:[#allocation2 + $0x220] sm:$0xff]
    %v229 = vld [vmem:[#allocation2 + $0x228] sm:$0xff]
    %v230 = vld [vmem:[#allocation2 + $0x230] sm:$0xff]
    %v231 = vld [vmem:[#allocation2 + $0x238] sm:$0xff]
    %v232 = vld [vmem:[#allocation2 + $0x240] sm:$0xff]
    %v233 = vld [vmem:[#allocation2 + $0x248] sm:$0xff]
    %v234 = vld [vmem:[#allocation2 + $0x250] sm:$0xff]
    %v235 = vld [vmem:[#allocation2 + $0x258] sm:$0xff]
    %v236 = vld [vmem:[#allocation2 + $0x260] sm:$0xff]
    %v237 = vld [vmem:[#allocation2 + $0x268] sm:$0xff]
    %v238 = vld [vmem:[#allocation2 + $0x270] sm:$0xff]
    %v239 = vld [vmem:[#allocation2 + $0x278] sm:$0xff]
    %v240 = vld [vmem:[#allocation2 + $0x280] sm:$0xff]
    %v241 = vld [vmem:[#allocation2 + $0x288] sm:$0xff]
    %v242 = vld [vmem:[#allocation2 + $0x290] sm:$0xff]
    %v243 = vld [vmem:[#allocation2 + $0x298] sm:$0xff]
    %v244 = vld [vmem:[#allocation2 + $0x2a0] sm:$0xff]
    %v245 = vld [vmem:[#allocation2 + $0x2a8] sm:$0xff]
    %v246 = vld [vmem:[#allocation2 + $0x2b0] sm:$0xff]
    %v247 = vld [vmem:[#allocation2 + $0x2b8] sm:$0xff]
    %v248 = vld [vmem:[#allocation2 + $0x2c0] sm:$0xff]
    %v249 = vld [vmem:[#allocation2 + $0x2c8] sm:$0xff]
    %v250 = vld [vmem:[#allocation2 + $0x2d0] sm:$0xff]
    %v251 = vld [vmem:[#allocation2 + $0x2d8] sm:$0xff]
    %v252 = vld [vmem:[#allocation2 + $0x2e0] sm:$0xff]
    %v253 = vld [vmem:[#allocation2 + $0x2e8] sm:$0xff]
    %v254 = vld [vmem:[#allocation2 + $0x2f0] sm:$0xff]
    %v255 = vld [vmem:[#allocation2 + $0x2f8] sm:$0xff]
    %v256 = vld [vmem:[#allocation3] sm:$0xf]
    %v257 = vld [vmem:[#allocation3 + $0x4] sm:$0xf]
    %v258 = vld [vmem:[#allocation3 + $0x8] sm:$0xf]
    %v259 = vld [vmem:[#allocation3 + $0xc] sm:$0xf]
    %v260 = vld [vmem:[#allocation3 + $0x10] sm:$0xf]
    %v261 = vld [vmem:[#allocation3 + $0x14] sm:$0xf]
    %v262 = vld [vmem:[#allocation3 + $0x18] sm:$0xf]
    %v263 = vld [vmem:[#allocation3 + $0x1c] sm:$0xf]
    %v264 = vld [vmem:[#allocation3 + $0x20] sm:$0xf]
    %v265 = vld [vmem:[#allocation3 + $0x24] sm:$0xf]
    %v266 = vld [vmem:[#allocation3 + $0x28] sm:$0xf]
    %v267 = vld [vmem:[#allocation3 + $0x2c] sm:$0xf]
    %v268 = vld [vmem:[#allocation3 + $0x30] sm:$0xf]
    %v269 = vld [vmem:[#allocation3 + $0x34] sm:$0xf]
    %v270 = vld [vmem:[#allocation3 + $0x38] sm:$0xf]
    %v271 = vld [vmem:[#allocation3 + $0x3c] sm:$0xf]
    %v272 = vld [vmem:[#allocation3 + $0x40] sm:$0xf]
    %v273 = vld [vmem:[#allocation3 + $0x44] sm:$0xf]
    %v274 = vld [vmem:[#allocation3 + $0x48] sm:$0xf]
    %v275 = vld [vmem:[#allocation3 + $0x4c] sm:$0xf]
    %v276 = vld [vmem:[#allocation3 + $0x50] sm:$0xf]
    %v277 = vld [vmem:[#allocation3 + $0x54] sm:$0xf]
    %v278 = vld [vmem:[#allocation3 + $0x58] sm:$0xf]
    %v279 = vld [vmem:[#allocation3 + $0x5c] sm:$0xf]
    %v280 = vld [vmem:[#allocation3 + $0x60] sm:$0xf]
    %v281 = vld [vmem:[#allocation3 + $0x64] sm:$0xf]
    %v282 = vld [vmem:[#allocation3 + $0x68] sm:$0xf]
    %v283 = vld [vmem:[#allocation3 + $0x6c] sm:$0xf]
    %v284 = vld [vmem:[#allocation3 + $0x70] sm:$0xf]
    %v285 = vld [vmem:[#allocation3 + $0x74] sm:$0xf]
    %v286 = vld [vmem:[#allocation3 + $0x78] sm:$0xf]
    %v287 = vld [vmem:[#allocation3 + $0x7c] sm:$0xf]
    %v288 = vld [vmem:[#allocation6] sm:$0xff]
    %v289 = vld [vmem:[#allocation6 + $0x8] sm:$0xf]
    %v290 = vld [vmem:[#allocation6 + $0xc] sm:$0xff]
    %v291 = vld [vmem:[#allocation6 + $0x14] sm:$0xf]
    %v292 = vld [vmem:[#allocation6 + $0x18] sm:$0xff]
    %v293 = vld [vmem:[#allocation6 + $0x20] sm:$0xf]
    %v294 = vld [vmem:[#allocation6 + $0x24] sm:$0xff]
    %v295 = vld [vmem:[#allocation6 + $0x2c] sm:$0xf]
    %v296 = vld [vmem:[#allocation6 + $0x30] sm:$0xff]
    %v297 = vld [vmem:[#allocation6 + $0x38] sm:$0xf]
    %v298 = vld [vmem:[#allocation6 + $0x3c] sm:$0xff]
    %v299 = vld [vmem:[#allocation6 + $0x44] sm:$0xf]
    %v300 = vld [vmem:[#allocation6 + $0x48] sm:$0xff]
    %v301 = vld [vmem:[#allocation6 + $0x50] sm:$0xf]
    %v302 = vld [vmem:[#allocation6 + $0x54] sm:$0xff]
    %v303 = vld [vmem:[#allocation6 + $0x5c] sm:$0xf]
    %v304 = vld [vmem:[#allocation6 + $0x60] sm:$0xff]
    %v305 = vld [vmem:[#allocation6 + $0x68] sm:$0xf]
    %v306 = vld [vmem:[#allocation6 + $0x6c] sm:$0xff]
    %v307 = vld [vmem:[#allocation6 + $0x74] sm:$0xf]
    %v308 = vld [vmem:[#allocation6 + $0x78] sm:$0xff]
    %v309 = vld [vmem:[#allocation6 + $0x80] sm:$0xf]
    %v310 = vld [vmem:[#allocation6 + $0x84] sm:$0xff]
    %v311 = vld [vmem:[#allocation6 + $0x8c] sm:$0xf]
    %v312 = vld [vmem:[#allocation6 + $0x90] sm:$0xff]
    %v313 = vld [vmem:[#allocation6 + $0x98] sm:$0xf]
    %v314 = vld [vmem:[#allocation6 + $0x9c] sm:$0xff]
    %v315 = vld [vmem:[#allocation6 + $0xa4] sm:$0xf]
    %v316 = vld [vmem:[#allocation6 + $0xa8] sm:$0xff]
    %v317 = vld [vmem:[#allocation6 + $0xb0] sm:$0xf]
    %v318 = vld [vmem:[#allocation6 + $0xb4] sm:$0xff]
    %v319 = vld [vmem:[#allocation6 + $0xbc] sm:$0xf]
    %v352 = vunpack.c.l.b16 %v256
    %v353 = vunpack.c.l.b16 %v257
    %v354 = vunpack.c.l.b16 %v258
    %v355 = vunpack.c.l.b16 %v259
    %v356 = vunpack.c.l.b16 %v260
    %v357 = vunpack.c.l.b16 %v261
    %v358 = vunpack.c.l.b16 %v262
    %v359 = vunpack.c.l.b16 %v263
    %v360 = vunpack.c.l.b16 %v264
    %v361 = vunpack.c.l.b16 %v265
    %v362 = vunpack.c.l.b16 %v266
    %v363 = vunpack.c.l.b16 %v267
    %v364 = vunpack.c.l.b16 %v268
    %v365 = vunpack.c.l.b16 %v269
    %v366 = vunpack.c.l.b16 %v270
    %v367 = vunpack.c.l.b16 %v271
    %v368 = vunpack.c.l.b16 %v272
    %v369 = vunpack.c.l.b16 %v273
    %v370 = vunpack.c.l.b16 %v274
    %v371 = vunpack.c.l.b16 %v275
    %v372 = vunpack.c.l.b16 %v276
    %v373 = vunpack.c.l.b16 %v277
    %v374 = vunpack.c.l.b16 %v278
    %v375 = vunpack.c.l.b16 %v279
    %v376 = vunpack.c.l.b16 %v280
    %v377 = vunpack.c.l.b16 %v281
    %v378 = vunpack.c.l.b16 %v282
    %v379 = vunpack.c.l.b16 %v283
    %v380 = vunpack.c.l.b16 %v284
    %v381 = vunpack.c.l.b16 %v285
    %v382 = vunpack.c.l.b16 %v286
    %v383 = vunpack.c.l.b16 %v287
    %v384 = vpack.c.b16 %v353, %v352
    %v385 = vpack.c.b16 %v355, %v354
    %v386 = vpack.c.b16 %v357, %v356
    %v387 = vpack.c.b16 %v359, %v358
    %v388 = vpack.c.b16 %v361, %v360
    %v389 = vpack.c.b16 %v363, %v362
    %v390 = vpack.c.b16 %v365, %v364
    %v391 = vpack.c.b16 %v367, %v366
    %v392 = vpack.c.b16 %v369, %v368
    %v393 = vpack.c.b16 %v371, %v370
    %v394 = vpack.c.b16 %v373, %v372
    %v395 = vpack.c.b16 %v375, %v374
    %v396 = vpack.c.b16 %v377, %v376
    %v397 = vpack.c.b16 %v379, %v378
    %v398 = vpack.c.b16 %v381, %v380
    %v399 = vpack.c.b16 %v383, %v382
    %v448 = vunpack.c.l.b16 %v288
    %v449 = vunpack.c.h.b16 %v288
    %v450 = vunpack.c.l.b16 %v289
    %v451 = vunpack.c.l.b16 %v290
    %v452 = vunpack.c.h.b16 %v290
    %v453 = vunpack.c.l.b16 %v291
    %v454 = vunpack.c.l.b16 %v292
    %v455 = vunpack.c.h.b16 %v292
    %v456 = vunpack.c.l.b16 %v293
    %v457 = vunpack.c.l.b16 %v294
    %v458 = vunpack.c.h.b16 %v294
    %v459 = vunpack.c.l.b16 %v295
    %v460 = vunpack.c.l.b16 %v296
    %v461 = vunpack.c.h.b16 %v296
    %v462 = vunpack.c.l.b16 %v297
    %v463 = vunpack.c.l.b16 %v298
    %v464 = vunpack.c.h.b16 %v298
    %v465 = vunpack.c.l.b16 %v299
    %v466 = vunpack.c.l.b16 %v300
    %v467 = vunpack.c.h.b16 %v300
    %v468 = vunpack.c.l.b16 %v301
    %v469 = vunpack.c.l.b16 %v302
    %v470 = vunpack.c.h.b16 %v302
    %v471 = vunpack.c.l.b16 %v303
    %v472 = vunpack.c.l.b16 %v304
    %v473 = vunpack.c.h.b16 %v304
    %v474 = vunpack.c.l.b16 %v305
    %v475 = vunpack.c.l.b16 %v306
    %v476 = vunpack.c.h.b16 %v306
    %v477 = vunpack.c.l.b16 %v307
    %v478 = vunpack.c.l.b16 %v308
    %v479 = vunpack.c.h.b16 %v308
    %v480 = vunpack.c.l.b16 %v309
    %v481 = vunpack.c.l.b16 %v310
    %v482 = vunpack.c.h.b16 %v310
    %v483 = vunpack.c.l.b16 %v311
    %v484 = vunpack.c.l.b16 %v312
    %v485 = vunpack.c.h.b16 %v312
    %v486 = vunpack.c.l.b16 %v313
    %v487 = vunpack.c.l.b16 %v314
    %v488 = vunpack.c.h.b16 %v314
    %v489 = vunpack.c.l.b16 %v315
    %v490 = vunpack.c.l.b16 %v316
    %v491 = vunpack.c.h.b16 %v316
    %v492 = vunpack.c.l.b16 %v317
    %v493 = vunpack.c.l.b16 %v318
    %v494 = vunpack.c.h.b16 %v318
    %v495 = vunpack.c.l.b16 %v319
    %v496 = vpack.c.b16 %v451, %v448
    %v497 = vpack.c.b16 %v452, %v449
    %v498 = vpack.c.b16 %v453, %v450
    %v499 = vpack.c.b16 %v457, %v454
    %v500 = vpack.c.b16 %v458, %v455
    %v501 = vpack.c.b16 %v459, %v456
    %v502 = vpack.c.b16 %v463, %v460
    %v503 = vpack.c.b16 %v464, %v461
    %v504 = vpack.c.b16 %v465, %v462
    %v505 = vpack.c.b16 %v469, %v466
    %v506 = vpack.c.b16 %v470, %v467
    %v507 = vpack.c.b16 %v471, %v468
    %v508 = vpack.c.b16 %v475, %v472
    %v509 = vpack.c.b16 %v476, %v473
    %v510 = vpack.c.b16 %v477, %v474
    %v511 = vpack.c.b16 %v481, %v478
    %v512 = vpack.c.b16 %v482, %v479
    %v513 = vpack.c.b16 %v483, %v480
    %v514 = vpack.c.b16 %v487, %v484
    %v515 = vpack.c.b16 %v488, %v485
    %v516 = vpack.c.b16 %v489, %v486
    %v517 = vpack.c.b16 %v493, %v490
    %v518 = vpack.c.b16 %v494, %v491
    %v519 = vpack.c.b16 %v495, %v492
    %544 = vmatpush.bf16.msra.mxu0 %v517
    %545 = vmatpush.bf16.msra.mxu0 %v514
    %546 = vmatpush.bf16.msra.mxu0 %v511
    %547 = vmatpush.bf16.msra.mxu0 %v508
    %548 = vmatpush.bf16.msra.mxu0 %v505
    %549 = vmatpush.bf16.msra.mxu0 %v502
    %550 = vmatpush.bf16.msra.mxu0 %v499
    %551 = vmatpush.bf16.msra.mxu0 %v496
    %552 = vmatmul.bf16.gmra.mxu0 %v384
    %v553 = vpop.f32.mrf.mxu0
    %v554 = vadd.f32 0.0, %v553
    %v555 = vpop.f32.mrf.mxu0
    %v556 = vadd.f32 0.0, %v555
    %557 = vmatmul.bf16.gmra.mxu0 %v385
    %v558 = vpop.f32.mrf.mxu0
    %v559 = vadd.f32 0.0, %v558
    %v560 = vpop.f32.mrf.mxu0
    %v561 = vadd.f32 0.0, %v560
    %562 = vmatmul.bf16.gmra.mxu0 %v386
    %v563 = vpop.f32.mrf.mxu0
    %v564 = vadd.f32 0.0, %v563
    %v565 = vpop.f32.mrf.mxu0
    %v566 = vadd.f32 0.0, %v565
    %567 = vmatmul.bf16.gmra.mxu0 %v387
    %v568 = vpop.f32.mrf.mxu0
    %v569 = vadd.f32 0.0, %v568
    %v570 = vpop.f32.mrf.mxu0
    %v571 = vadd.f32 0.0, %v570
    %572 = vmatmul.bf16.gmra.mxu0 %v388
    %v573 = vpop.f32.mrf.mxu0
    %v574 = vadd.f32 0.0, %v573
    %v575 = vpop.f32.mrf.mxu0
    %v576 = vadd.f32 0.0, %v575
    %577 = vmatmul.bf16.gmra.mxu0 %v389
    %v578 = vpop.f32.mrf.mxu0
    %v579 = vadd.f32 0.0, %v578
    %v580 = vpop.f32.mrf.mxu0
    %v581 = vadd.f32 0.0, %v580
    %582 = vmatmul.bf16.gmra.mxu0 %v390
    %v583 = vpop.f32.mrf.mxu0
    %v584 = vadd.f32 0.0, %v583
    %v585 = vpop.f32.mrf.mxu0
    %v586 = vadd.f32 0.0, %v585
    %587 = vmatmul.bf16.gmra.mxu0 %v391
    %v588 = vpop.f32.mrf.mxu0
    %v589 = vadd.f32 0.0, %v588
    %v590 = vpop.f32.mrf.mxu0
    %v591 = vadd.f32 0.0, %v590
    %592 = vmatmul.bf16.gmra.mxu0 %v392
    %v593 = vpop.f32.mrf.mxu0
    %v594 = vadd.f32 0.0, %v593
    %v595 = vpop.f32.mrf.mxu0
    %v596 = vadd.f32 0.0, %v595
    %597 = vmatmul.bf16.gmra.mxu0 %v393
    %v598 = vpop.f32.mrf.mxu0
    %v599 = vadd.f32 0.0, %v598
    %v600 = vpop.f32.mrf.mxu0
    %v601 = vadd.f32 0.0, %v600
    %602 = vmatmul.bf16.gmra.mxu0 %v394
    %v603 = vpop.f32.mrf.mxu0
    %v604 = vadd.f32 0.0, %v603
    %v605 = vpop.f32.mrf.mxu0
    %v606 = vadd.f32 0.0, %v605
    %607 = vmatmul.bf16.gmra.mxu0 %v395
    %v608 = vpop.f32.mrf.mxu0
    %v609 = vadd.f32 0.0, %v608
    %v610 = vpop.f32.mrf.mxu0
    %v611 = vadd.f32 0.0, %v610
    %612 = vmatmul.bf16.gmra.mxu0 %v396
    %v613 = vpop.f32.mrf.mxu0
    %v614 = vadd.f32 0.0, %v613
    %v615 = vpop.f32.mrf.mxu0
    %v616 = vadd.f32 0.0, %v615
    %617 = vmatmul.bf16.gmra.mxu0 %v397
    %v618 = vpop.f32.mrf.mxu0
    %v619 = vadd.f32 0.0, %v618
    %v620 = vpop.f32.mrf.mxu0
    %v621 = vadd.f32 0.0, %v620
    %622 = vmatmul.bf16.gmra.mxu0 %v398
    %v623 = vpop.f32.mrf.mxu0
    %v624 = vadd.f32 0.0, %v623
    %v625 = vpop.f32.mrf.mxu0
    %v626 = vadd.f32 0.0, %v625
    %627 = vmatmul.bf16.gmra.mxu0 %v399
    %v628 = vpop.f32.mrf.mxu0
    %v629 = vadd.f32 0.0, %v628
    %v630 = vpop.f32.mrf.mxu0
    %v631 = vadd.f32 0.0, %v630
    %632 = vdwg.mxu0
    %633 = vmatpush.bf16.msra.mxu0 %v518
    %634 = vmatpush.bf16.msra.mxu0 %v515
    %635 = vmatpush.bf16.msra.mxu0 %v512
    %636 = vmatpush.bf16.msra.mxu0 %v509
    %637 = vmatpush.bf16.msra.mxu0 %v506
    %638 = vmatpush.bf16.msra.mxu0 %v503
    %639 = vmatpush.bf16.msra.mxu0 %v500
    %640 = vmatpush.bf16.msra.mxu0 %v497
    %641 = vmatmul.bf16.gmra.mxu0 %v384
    %v642 = vpop.f32.mrf.mxu0
    %v643 = vadd.f32 0.0, %v642
    %v644 = vpop.f32.mrf.mxu0
    %v645 = vadd.f32 0.0, %v644
    %646 = vmatmul.bf16.gmra.mxu0 %v385
    %v647 = vpop.f32.mrf.mxu0
    %v648 = vadd.f32 0.0, %v647
    %v649 = vpop.f32.mrf.mxu0
    %v650 = vadd.f32 0.0, %v649
    %651 = vmatmul.bf16.gmra.mxu0 %v386
    %v652 = vpop.f32.mrf.mxu0
    %v653 = vadd.f32 0.0, %v652
    %v654 = vpop.f32.mrf.mxu0
    %v655 = vadd.f32 0.0, %v654
    %656 = vmatmul.bf16.gmra.mxu0 %v387
    %v657 = vpop.f32.mrf.mxu0
    %v658 = vadd.f32 0.0, %v657
    %v659 = vpop.f32.mrf.mxu0
    %v660 = vadd.f32 0.0, %v659
    %661 = vmatmul.bf16.gmra.mxu0 %v388
    %v662 = vpop.f32.mrf.mxu0
    %v663 = vadd.f32 0.0, %v662
    %v664 = vpop.f32.mrf.mxu0
    %v665 = vadd.f32 0.0, %v664
    %666 = vmatmul.bf16.gmra.mxu0 %v389
    %v667 = vpop.f32.mrf.mxu0
    %v668 = vadd.f32 0.0, %v667
    %v669 = vpop.f32.mrf.mxu0
    %v670 = vadd.f32 0.0, %v669
    %671 = vmatmul.bf16.gmra.mxu0 %v390
    %v672 = vpop.f32.mrf.mxu0
    %v673 = vadd.f32 0.0, %v672
    %v674 = vpop.f32.mrf.mxu0
    %v675 = vadd.f32 0.0, %v674
    %676 = vmatmul.bf16.gmra.mxu0 %v391
    %v677 = vpop.f32.mrf.mxu0
    %v678 = vadd.f32 0.0, %v677
    %v679 = vpop.f32.mrf.mxu0
    %v680 = vadd.f32 0.0, %v679
    %681 = vmatmul.bf16.gmra.mxu0 %v392
    %v682 = vpop.f32.mrf.mxu0
    %v683 = vadd.f32 0.0, %v682
    %v684 = vpop.f32.mrf.mxu0
    %v685 = vadd.f32 0.0, %v684
    %686 = vmatmul.bf16.gmra.mxu0 %v393
    %v687 = vpop.f32.mrf.mxu0
    %v688 = vadd.f32 0.0, %v687
    %v689 = vpop.f32.mrf.mxu0
    %v690 = vadd.f32 0.0, %v689
    %691 = vmatmul.bf16.gmra.mxu0 %v394
    %v692 = vpop.f32.mrf.mxu0
    %v693 = vadd.f32 0.0, %v692
    %v694 = vpop.f32.mrf.mxu0
    %v695 = vadd.f32 0.0, %v694
    %696 = vmatmul.bf16.gmra.mxu0 %v395
    %v697 = vpop.f32.mrf.mxu0
    %v698 = vadd.f32 0.0, %v697
    %v699 = vpop.f32.mrf.mxu0
    %v700 = vadd.f32 0.0, %v699
    %701 = vmatmul.bf16.gmra.mxu0 %v396
    %v702 = vpop.f32.mrf.mxu0
    %v703 = vadd.f32 0.0, %v702
    %v704 = vpop.f32.mrf.mxu0
    %v705 = vadd.f32 0.0, %v704
    %706 = vmatmul.bf16.gmra.mxu0 %v397
    %v707 = vpop.f32.mrf.mxu0
    %v708 = vadd.f32 0.0, %v707
    %v709 = vpop.f32.mrf.mxu0
    %v710 = vadd.f32 0.0, %v709
    %711 = vmatmul.bf16.gmra.mxu0 %v398
    %v712 = vpop.f32.mrf.mxu0
    %v713 = vadd.f32 0.0, %v712
    %v714 = vpop.f32.mrf.mxu0
    %v715 = vadd.f32 0.0, %v714
    %716 = vmatmul.bf16.gmra.mxu0 %v399
    %v717 = vpop.f32.mrf.mxu0
    %v718 = vadd.f32 0.0, %v717
    %v719 = vpop.f32.mrf.mxu0
    %v720 = vadd.f32 0.0, %v719
    %721 = vdwg.mxu0
    %722 = vmatpush.bf16.msra.mxu0 %v519
    %723 = vmatpush.bf16.msra.mxu0 %v516
    %724 = vmatpush.bf16.msra.mxu0 %v513
    %725 = vmatpush.bf16.msra.mxu0 %v510
    %726 = vmatpush.bf16.msra.mxu0 %v507
    %727 = vmatpush.bf16.msra.mxu0 %v504
    %728 = vmatpush.bf16.msra.mxu0 %v501
    %729 = vmatpush.bf16.msra.mxu0 %v498
    %730 = vmatmul.bf16.gmra.mxu0 %v384
    %v731 = vpop.f32.mrf.mxu0
    %v732 = vadd.f32 0.0, %v731
    %v733 = vpop.f32.mrf.mxu0
    %v734 = vadd.f32 0.0, %v733
    %735 = vmatmul.bf16.gmra.mxu0 %v385
    %v736 = vpop.f32.mrf.mxu0
    %v737 = vadd.f32 0.0, %v736
    %v738 = vpop.f32.mrf.mxu0
    %v739 = vadd.f32 0.0, %v738
    %740 = vmatmul.bf16.gmra.mxu0 %v386
    %v741 = vpop.f32.mrf.mxu0
    %v742 = vadd.f32 0.0, %v741
    %v743 = vpop.f32.mrf.mxu0
    %v744 = vadd.f32 0.0, %v743
    %745 = vmatmul.bf16.gmra.mxu0 %v387
    %v746 = vpop.f32.mrf.mxu0
    %v747 = vadd.f32 0.0, %v746
    %v748 = vpop.f32.mrf.mxu0
    %v749 = vadd.f32 0.0, %v748
    %750 = vmatmul.bf16.gmra.mxu0 %v388
    %v751 = vpop.f32.mrf.mxu0
    %v752 = vadd.f32 0.0, %v751
    %v753 = vpop.f32.mrf.mxu0
    %v754 = vadd.f32 0.0, %v753
    %755 = vmatmul.bf16.gmra.mxu0 %v389
    %v756 = vpop.f32.mrf.mxu0
    %v757 = vadd.f32 0.0, %v756
    %v758 = vpop.f32.mrf.mxu0
    %v759 = vadd.f32 0.0, %v758
    %760 = vmatmul.bf16.gmra.mxu0 %v390
    %v761 = vpop.f32.mrf.mxu0
    %v762 = vadd.f32 0.0, %v761
    %v763 = vpop.f32.mrf.mxu0
    %v764 = vadd.f32 0.0, %v763
    %765 = vmatmul.bf16.gmra.mxu0 %v391
    %v766 = vpop.f32.mrf.mxu0
    %v767 = vadd.f32 0.0, %v766
    %v768 = vpop.f32.mrf.mxu0
    %v769 = vadd.f32 0.0, %v768
    %770 = vmatmul.bf16.gmra.mxu0 %v392
    %v771 = vpop.f32.mrf.mxu0
    %v772 = vadd.f32 0.0, %v771
    %v773 = vpop.f32.mrf.mxu0
    %v774 = vadd.f32 0.0, %v773
    %775 = vmatmul.bf16.gmra.mxu0 %v393
    %v776 = vpop.f32.mrf.mxu0
    %v777 = vadd.f32 0.0, %v776
    %v778 = vpop.f32.mrf.mxu0
    %v779 = vadd.f32 0.0, %v778
    %780 = vmatmul.bf16.gmra.mxu0 %v394
    %v781 = vpop.f32.mrf.mxu0
    %v782 = vadd.f32 0.0, %v781
    %v783 = vpop.f32.mrf.mxu0
    %v784 = vadd.f32 0.0, %v783
    %785 = vmatmul.bf16.gmra.mxu0 %v395
    %v786 = vpop.f32.mrf.mxu0
    %v787 = vadd.f32 0.0, %v786
    %v788 = vpop.f32.mrf.mxu0
    %v789 = vadd.f32 0.0, %v788
    %790 = vmatmul.bf16.gmra.mxu0 %v396
    %v791 = vpop.f32.mrf.mxu0
    %v792 = vadd.f32 0.0, %v791
    %v793 = vpop.f32.mrf.mxu0
    %v794 = vadd.f32 0.0, %v793
    %795 = vmatmul.bf16.gmra.mxu0 %v397
    %v796 = vpop.f32.mrf.mxu0
    %v797 = vadd.f32 0.0, %v796
    %v798 = vpop.f32.mrf.mxu0
    %v799 = vadd.f32 0.0, %v798
    %800 = vmatmul.bf16.gmra.mxu0 %v398
    %v801 = vpop.f32.mrf.mxu0
    %v802 = vadd.f32 0.0, %v801
    %v803 = vpop.f32.mrf.mxu0
    %v804 = vadd.f32 0.0, %v803
    %805 = vmatmul.bf16.gmra.mxu0 %v399
    %v806 = vpop.f32.mrf.mxu0
    %v807 = vadd.f32 0.0, %v806
    %v808 = vpop.f32.mrf.mxu0
    %v809 = vadd.f32 0.0, %v808
    %810 = vdwg.mxu0
    %v811 = vadd.f32 %v160, %v554
    %v812 = vadd.f32 %v161, %v643
    %v813 = vadd.f32 %v162, %v732
    %v814 = vadd.f32 %v163, %v556
    %v815 = vadd.f32 %v164, %v645
    %v816 = vadd.f32 %v165, %v734
    %v817 = vadd.f32 %v166, %v559
    %v818 = vadd.f32 %v167, %v648
    %v819 = vadd.f32 %v168, %v737
    %v820 = vadd.f32 %v169, %v561
    %v821 = vadd.f32 %v170, %v650
    %v822 = vadd.f32 %v171, %v739
    %v823 = vadd.f32 %v172, %v564
    %v824 = vadd.f32 %v173, %v653
    %v825 = vadd.f32 %v174, %v742
    %v826 = vadd.f32 %v175, %v566
    %v827 = vadd.f32 %v176, %v655
    %v828 = vadd.f32 %v177, %v744
    %v829 = vadd.f32 %v178, %v569
    %v830 = vadd.f32 %v179, %v658
    %v831 = vadd.f32 %v180, %v747
    %v832 = vadd.f32 %v181, %v571
    %v833 = vadd.f32 %v182, %v660
    %v834 = vadd.f32 %v183, %v749
    %v835 = vadd.f32 %v184, %v574
    %v836 = vadd.f32 %v185, %v663
    %v837 = vadd.f32 %v186, %v752
    %v838 = vadd.f32 %v187, %v576
    %v839 = vadd.f32 %v188, %v665
    %v840 = vadd.f32 %v189, %v754
    %v841 = vadd.f32 %v190, %v579
    %v842 = vadd.f32 %v191, %v668
    %v843 = vadd.f32 %v192, %v757
    %v844 = vadd.f32 %v193, %v581
    %v845 = vadd.f32 %v194, %v670
    %v846 = vadd.f32 %v195, %v759
    %v847 = vadd.f32 %v196, %v584
    %v848 = vadd.f32 %v197, %v673
    %v849 = vadd.f32 %v198, %v762
    %v850 = vadd.f32 %v199, %v586
    %v851 = vadd.f32 %v200, %v675
    %v852 = vadd.f32 %v201, %v764
    %v853 = vadd.f32 %v202, %v589
    %v854 = vadd.f32 %v203, %v678
    %v855 = vadd.f32 %v204, %v767
    %v856 = vadd.f32 %v205, %v591
    %v857 = vadd.f32 %v206, %v680
    %v858 = vadd.f32 %v207, %v769
    %v859 = vadd.f32 %v208, %v594
    %v860 = vadd.f32 %v209, %v683
    %v861 = vadd.f32 %v210, %v772
    %v862 = vadd.f32 %v211, %v596
    %v863 = vadd.f32 %v212, %v685
    %v864 = vadd.f32 %v213, %v774
    %v865 = vadd.f32 %v214, %v599
    %v866 = vadd.f32 %v215, %v688
    %v867 = vadd.f32 %v216, %v777
    %v868 = vadd.f32 %v217, %v601
    %v869 = vadd.f32 %v218, %v690
    %v870 = vadd.f32 %v219, %v779
    %v871 = vadd.f32 %v220, %v604
    %v872 = vadd.f32 %v221, %v693
    %v873 = vadd.f32 %v222, %v782
    %v874 = vadd.f32 %v223, %v606
    %v875 = vadd.f32 %v224, %v695
    %v876 = vadd.f32 %v225, %v784
    %v877 = vadd.f32 %v226, %v609
    %v878 = vadd.f32 %v227, %v698
    %v879 = vadd.f32 %v228, %v787
    %v880 = vadd.f32 %v229, %v611
    %v881 = vadd.f32 %v230, %v700
    %v882 = vadd.f32 %v231, %v789
    %v883 = vadd.f32 %v232, %v614
    %v884 = vadd.f32 %v233, %v703
    %v885 = vadd.f32 %v234, %v792
    %v886 = vadd.f32 %v235, %v616
    %v887 = vadd.f32 %v236, %v705
    %v888 = vadd.f32 %v237, %v794
    %v889 = vadd.f32 %v238, %v619
    %v890 = vadd.f32 %v239, %v708
    %v891 = vadd.f32 %v240, %v797
    %v892 = vadd.f32 %v241, %v621
    %v893 = vadd.f32 %v242, %v710
    %v894 = vadd.f32 %v243, %v799
    %v895 = vadd.f32 %v244, %v624
    %v896 = vadd.f32 %v245, %v713
    %v897 = vadd.f32 %v246, %v802
    %v898 = vadd.f32 %v247, %v626
    %v899 = vadd.f32 %v248, %v715
    %v900 = vadd.f32 %v249, %v804
    %v901 = vadd.f32 %v250, %v629
    %v902 = vadd.f32 %v251, %v718
    %v903 = vadd.f32 %v252, %v807
    %v904 = vadd.f32 %v253, %v631
    %v905 = vadd.f32 %v254, %v720
    %v906 = vadd.f32 %v255, %v809
    %907 = vst [vmem:[#allocation2] sm:$0xff] %v811
    %908 = vst [vmem:[#allocation2 + $0x8] sm:$0xff] %v812
    %909 = vst [vmem:[#allocation2 + $0x10] sm:$0xff] %v813
    %910 = vst [vmem:[#allocation2 + $0x18] sm:$0xff] %v814
    %911 = vst [vmem:[#allocation2 + $0x20] sm:$0xff] %v815
    %912 = vst [vmem:[#allocation2 + $0x28] sm:$0xff] %v816
    %913 = vst [vmem:[#allocation2 + $0x30] sm:$0xff] %v817
    %914 = vst [vmem:[#allocation2 + $0x38] sm:$0xff] %v818
    %915 = vst [vmem:[#allocation2 + $0x40] sm:$0xff] %v819
    %916 = vst [vmem:[#allocation2 + $0x48] sm:$0xff] %v820
    %917 = vst [vmem:[#allocation2 + $0x50] sm:$0xff] %v821
    %918 = vst [vmem:[#allocation2 + $0x58] sm:$0xff] %v822
    %919 = vst [vmem:[#allocation2 + $0x60] sm:$0xff] %v823
    %920 = vst [vmem:[#allocation2 + $0x68] sm:$0xff] %v824
    %921 = vst [vmem:[#allocation2 + $0x70] sm:$0xff] %v825
    %922 = vst [vmem:[#allocation2 + $0x78] sm:$0xff] %v826
    %923 = vst [vmem:[#allocation2 + $0x80] sm:$0xff] %v827
    %924 = vst [vmem:[#allocation2 + $0x88] sm:$0xff] %v828
    %925 = vst [vmem:[#allocation2 + $0x90] sm:$0xff] %v829
    %926 = vst [vmem:[#allocation2 + $0x98] sm:$0xff] %v830
    %927 = vst [vmem:[#allocation2 + $0xa0] sm:$0xff] %v831
    %928 = vst [vmem:[#allocation2 + $0xa8] sm:$0xff] %v832
    %929 = vst [vmem:[#allocation2 + $0xb0] sm:$0xff] %v833
    %930 = vst [vmem:[#allocation2 + $0xb8] sm:$0xff] %v834
    %931 = vst [vmem:[#allocation2 + $0xc0] sm:$0xff] %v835
    %932 = vst [vmem:[#allocation2 + $0xc8] sm:$0xff] %v836
    %933 = vst [vmem:[#allocation2 + $0xd0] sm:$0xff] %v837
    %934 = vst [vmem:[#allocation2 + $0xd8] sm:$0xff] %v838
    %935 = vst [vmem:[#allocation2 + $0xe0] sm:$0xff] %v839
    %936 = vst [vmem:[#allocation2 + $0xe8] sm:$0xff] %v840
    %937 = vst [vmem:[#allocation2 + $0xf0] sm:$0xff] %v841
    %938 = vst [vmem:[#allocation2 + $0xf8] sm:$0xff] %v842
    %939 = vst [vmem:[#allocation2 + $0x100] sm:$0xff] %v843
    %940 = vst [vmem:[#allocation2 + $0x108] sm:$0xff] %v844
    %941 = vst [vmem:[#allocation2 + $0x110] sm:$0xff] %v845
    %942 = vst [vmem:[#allocation2 + $0x118] sm:$0xff] %v846
    %943 = vst [vmem:[#allocation2 + $0x120] sm:$0xff] %v847
    %944 = vst [vmem:[#allocation2 + $0x128] sm:$0xff] %v848
    %945 = vst [vmem:[#allocation2 + $0x130] sm:$0xff] %v849
    %946 = vst [vmem:[#allocation2 + $0x138] sm:$0xff] %v850
    %947 = vst [vmem:[#allocation2 + $0x140] sm:$0xff] %v851
    %948 = vst [vmem:[#allocation2 + $0x148] sm:$0xff] %v852
    %949 = vst [vmem:[#allocation2 + $0x150] sm:$0xff] %v853
    %950 = vst [vmem:[#allocation2 + $0x158] sm:$0xff] %v854
    %951 = vst [vmem:[#allocation2 + $0x160] sm:$0xff] %v855
    %952 = vst [vmem:[#allocation2 + $0x168] sm:$0xff] %v856
    %953 = vst [vmem:[#allocation2 + $0x170] sm:$0xff] %v857
    %954 = vst [vmem:[#allocation2 + $0x178] sm:$0xff] %v858
    %955 = vst [vmem:[#allocation2 + $0x180] sm:$0xff] %v859
    %956 = vst [vmem:[#allocation2 + $0x188] sm:$0xff] %v860
    %957 = vst [vmem:[#allocation2 + $0x190] sm:$0xff] %v861
    %958 = vst [vmem:[#allocation2 + $0x198] sm:$0xff] %v862
    %959 = vst [vmem:[#allocation2 + $0x1a0] sm:$0xff] %v863
    %960 = vst [vmem:[#allocation2 + $0x1a8] sm:$0xff] %v864
    %961 = vst [vmem:[#allocation2 + $0x1b0] sm:$0xff] %v865
    %962 = vst [vmem:[#allocation2 + $0x1b8] sm:$0xff] %v866
    %963 = vst [vmem:[#allocation2 + $0x1c0] sm:$0xff] %v867
    %964 = vst [vmem:[#allocation2 + $0x1c8] sm:$0xff] %v868
    %965 = vst [vmem:[#allocation2 + $0x1d0] sm:$0xff] %v869
    %966 = vst [vmem:[#allocation2 + $0x1d8] sm:$0xff] %v870
    %967 = vst [vmem:[#allocation2 + $0x1e0] sm:$0xff] %v871
    %968 = vst [vmem:[#allocation2 + $0x1e8] sm:$0xff] %v872
    %969 = vst [vmem:[#allocation2 + $0x1f0] sm:$0xff] %v873
    %970 = vst [vmem:[#allocation2 + $0x1f8] sm:$0xff] %v874
    %971 = vst [vmem:[#allocation2 + $0x200] sm:$0xff] %v875
    %972 = vst [vmem:[#allocation2 + $0x208] sm:$0xff] %v876
    %973 = vst [vmem:[#allocation2 + $0x210] sm:$0xff] %v877
    %974 = vst [vmem:[#allocation2 + $0x218] sm:$0xff] %v878
    %975 = vst [vmem:[#allocation2 + $0x220] sm:$0xff] %v879
    %976 = vst [vmem:[#allocation2 + $0x228] sm:$0xff] %v880
    %977 = vst [vmem:[#allocation2 + $0x230] sm:$0xff] %v881
    %978 = vst [vmem:[#allocation2 + $0x238] sm:$0xff] %v882
    %979 = vst [vmem:[#allocation2 + $0x240] sm:$0xff] %v883
    %980 = vst [vmem:[#allocation2 + $0x248] sm:$0xff] %v884
    %981 = vst [vmem:[#allocation2 + $0x250] sm:$0xff] %v885
    %982 = vst [vmem:[#allocation2 + $0x258] sm:$0xff] %v886
    %983 = vst [vmem:[#allocation2 + $0x260] sm:$0xff] %v887
    %984 = vst [vmem:[#allocation2 + $0x268] sm:$0xff] %v888
    %985 = vst [vmem:[#allocation2 + $0x270] sm:$0xff] %v889
    %986 = vst [vmem:[#allocation2 + $0x278] sm:$0xff] %v890
    %987 = vst [vmem:[#allocation2 + $0x280] sm:$0xff] %v891
    %988 = vst [vmem:[#allocation2 + $0x288] sm:$0xff] %v892
    %989 = vst [vmem:[#allocation2 + $0x290] sm:$0xff] %v893
    %990 = vst [vmem:[#allocation2 + $0x298] sm:$0xff] %v894
    %991 = vst [vmem:[#allocation2 + $0x2a0] sm:$0xff] %v895
    %992 = vst [vmem:[#allocation2 + $0x2a8] sm:$0xff] %v896
    %993 = vst [vmem:[#allocation2 + $0x2b0] sm:$0xff] %v897
    %994 = vst [vmem:[#allocation2 + $0x2b8] sm:$0xff] %v898
    %995 = vst [vmem:[#allocation2 + $0x2c0] sm:$0xff] %v899
    %996 = vst [vmem:[#allocation2 + $0x2c8] sm:$0xff] %v900
    %997 = vst [vmem:[#allocation2 + $0x2d0] sm:$0xff] %v901
    %998 = vst [vmem:[#allocation2 + $0x2d8] sm:$0xff] %v902
    %999 = vst [vmem:[#allocation2 + $0x2e0] sm:$0xff] %v903
    %1000 = vst [vmem:[#allocation2 + $0x2e8] sm:$0xff] %v904
    %1001 = vst [vmem:[#allocation2 + $0x2f0] sm:$0xff] %v905
    %1002 = vst [vmem:[#allocation2 + $0x2f8] sm:$0xff] %v906
    // Predicated region
    $region30: #{tpu_custom_call.1} parent=1 // pred_check
      %p1003 = pneg %p60
    $region31: #{tpu_custom_call.1} parent=1 // pred_check_branch
      %1005 = sbr.rel (%p1003) target = $region33
    $region32: #{tpu_custom_call.1} parent=1 // pred_region
      %v1006 = vld [vmem:[#allocation2] sm:$0xff]
      %v1007 = vld [vmem:[#allocation2 + $0x8] sm:$0xff]
      %v1008 = vld [vmem:[#allocation2 + $0x10] sm:$0xff]
      %v1009 = vld [vmem:[#allocation2 + $0x18] sm:$0xff]
      %v1010 = vld [vmem:[#allocation2 + $0x20] sm:$0xff]
      %v1011 = vld [vmem:[#allocation2 + $0x28] sm:$0xff]
      %v1012 = vld [vmem:[#allocation2 + $0x30] sm:$0xff]
      %v1013 = vld [vmem:[#allocation2 + $0x38] sm:$0xff]
      %v1014 = vld [vmem:[#allocation2 + $0x40] sm:$0xff]
      %v1015 = vld [vmem:[#allocation2 + $0x48] sm:$0xff]
      %v1016 = vld [vmem:[#allocation2 + $0x50] sm:$0xff]
      %v1017 = vld [vmem:[#allocation2 + $0x58] sm:$0xff]
      %v1018 = vld [vmem:[#allocation2 + $0x60] sm:$0xff]
      %v1019 = vld [vmem:[#allocation2 + $0x68] sm:$0xff]
      %v1020 = vld [vmem:[#allocation2 + $0x70] sm:$0xff]
      %v1021 = vld [vmem:[#allocation2 + $0x78] sm:$0xff]
      %v1022 = vld [vmem:[#allocation2 + $0x80] sm:$0xff]
      %v1023 = vld [vmem:[#allocation2 + $0x88] sm:$0xff]
      %v1024 = vld [vmem:[#allocation2 + $0x90] sm:$0xff]
      %v1025 = vld [vmem:[#allocation2 + $0x98] sm:$0xff]
      %v1026 = vld [vmem:[#allocation2 + $0xa0] sm:$0xff]
      %v1027 = vld [vmem:[#allocation2 + $0xa8] sm:$0xff]
      %v1028 = vld [vmem:[#allocation2 + $0xb0] sm:$0xff]
      %v1029 = vld [vmem:[#allocation2 + $0xb8] sm:$0xff]
      %v1030 = vld [vmem:[#allocation2 + $0xc0] sm:$0xff]
      %v1031 = vld [vmem:[#allocation2 + $0xc8] sm:$0xff]
      %v1032 = vld [vmem:[#allocation2 + $0xd0] sm:$0xff]
      %v1033 = vld [vmem:[#allocation2 + $0xd8] sm:$0xff]
      %v1034 = vld [vmem:[#allocation2 + $0xe0] sm:$0xff]
      %v1035 = vld [vmem:[#allocation2 + $0xe8] sm:$0xff]
      %v1036 = vld [vmem:[#allocation2 + $0xf0] sm:$0xff]
      %v1037 = vld [vmem:[#allocation2 + $0xf8] sm:$0xff]
      %v1038 = vld [vmem:[#allocation2 + $0x100] sm:$0xff]
      %v1039 = vld [vmem:[#allocation2 + $0x108] sm:$0xff]
      %v1040 = vld [vmem:[#allocation2 + $0x110] sm:$0xff]
      %v1041 = vld [vmem:[#allocation2 + $0x118] sm:$0xff]
      %v1042 = vld [vmem:[#allocation2 + $0x120] sm:$0xff]
      %v1043 = vld [vmem:[#allocation2 + $0x128] sm:$0xff]
      %v1044 = vld [vmem:[#allocation2 + $0x130] sm:$0xff]
      %v1045 = vld [vmem:[#allocation2 + $0x138] sm:$0xff]
      %v1046 = vld [vmem:[#allocation2 + $0x140] sm:$0xff]
      %v1047 = vld [vmem:[#allocation2 + $0x148] sm:$0xff]
      %v1048 = vld [vmem:[#allocation2 + $0x150] sm:$0xff]
      %v1049 = vld [vmem:[#allocation2 + $0x158] sm:$0xff]
      %v1050 = vld [vmem:[#allocation2 + $0x160] sm:$0xff]
      %v1051 = vld [vmem:[#allocation2 + $0x168] sm:$0xff]
      %v1052 = vld [vmem:[#allocation2 + $0x170] sm:$0xff]
      %v1053 = vld [vmem:[#allocation2 + $0x178] sm:$0xff]
      %v1054 = vld [vmem:[#allocation2 + $0x180] sm:$0xff]
      %v1055 = vld [vmem:[#allocation2 + $0x188] sm:$0xff]
      %v1056 = vld [vmem:[#allocation2 + $0x190] sm:$0xff]
      %v1057 = vld [vmem:[#allocation2 + $0x198] sm:$0xff]
      %v1058 = vld [vmem:[#allocation2 + $0x1a0] sm:$0xff]
      %v1059 = vld [vmem:[#allocation2 + $0x1a8] sm:$0xff]
      %v1060 = vld [vmem:[#allocation2 + $0x1b0] sm:$0xff]
      %v1061 = vld [vmem:[#allocation2 + $0x1b8] sm:$0xff]
      %v1062 = vld [vmem:[#allocation2 + $0x1c0] sm:$0xff]
      %v1063 = vld [vmem:[#allocation2 + $0x1c8] sm:$0xff]
      %v1064 = vld [vmem:[#allocation2 + $0x1d0] sm:$0xff]
      %v1065 = vld [vmem:[#allocation2 + $0x1d8] sm:$0xff]
      %v1066 = vld [vmem:[#allocation2 + $0x1e0] sm:$0xff]
      %v1067 = vld [vmem:[#allocation2 + $0x1e8] sm:$0xff]
      %v1068 = vld [vmem:[#allocation2 + $0x1f0] sm:$0xff]
      %v1069 = vld [vmem:[#allocation2 + $0x1f8] sm:$0xff]
      %v1070 = vld [vmem:[#allocation2 + $0x200] sm:$0xff]
      %v1071 = vld [vmem:[#allocation2 + $0x208] sm:$0xff]
      %v1072 = vld [vmem:[#allocation2 + $0x210] sm:$0xff]
      %v1073 = vld [vmem:[#allocation2 + $0x218] sm:$0xff]
      %v1074 = vld [vmem:[#allocation2 + $0x220] sm:$0xff]
      %v1075 = vld [vmem:[#allocation2 + $0x228] sm:$0xff]
      %v1076 = vld [vmem:[#allocation2 + $0x230] sm:$0xff]
      %v1077 = vld [vmem:[#allocation2 + $0x238] sm:$0xff]
      %v1078 = vld [vmem:[#allocation2 + $0x240] sm:$0xff]
      %v1079 = vld [vmem:[#allocation2 + $0x248] sm:$0xff]
      %v1080 = vld [vmem:[#allocation2 + $0x250] sm:$0xff]
      %v1081 = vld [vmem:[#allocation2 + $0x258] sm:$0xff]
      %v1082 = vld [vmem:[#allocation2 + $0x260] sm:$0xff]
      %v1083 = vld [vmem:[#allocation2 + $0x268] sm:$0xff]
      %v1084 = vld [vmem:[#allocation2 + $0x270] sm:$0xff]
      %v1085 = vld [vmem:[#allocation2 + $0x278] sm:$0xff]
      %v1086 = vld [vmem:[#allocation2 + $0x280] sm:$0xff]
      %v1087 = vld [vmem:[#allocation2 + $0x288] sm:$0xff]
      %v1088 = vld [vmem:[#allocation2 + $0x290] sm:$0xff]
      %v1089 = vld [vmem:[#allocation2 + $0x298] sm:$0xff]
      %v1090 = vld [vmem:[#allocation2 + $0x2a0] sm:$0xff]
      %v1091 = vld [vmem:[#allocation2 + $0x2a8] sm:$0xff]
      %v1092 = vld [vmem:[#allocation2 + $0x2b0] sm:$0xff]
      %v1093 = vld [vmem:[#allocation2 + $0x2b8] sm:$0xff]
      %v1094 = vld [vmem:[#allocation2 + $0x2c0] sm:$0xff]
      %v1095 = vld [vmem:[#allocation2 + $0x2c8] sm:$0xff]
      %v1096 = vld [vmem:[#allocation2 + $0x2d0] sm:$0xff]
      %v1097 = vld [vmem:[#allocation2 + $0x2d8] sm:$0xff]
      %v1098 = vld [vmem:[#allocation2 + $0x2e0] sm:$0xff]
      %v1099 = vld [vmem:[#allocation2 + $0x2e8] sm:$0xff]
      %v1100 = vld [vmem:[#allocation2 + $0x2f0] sm:$0xff]
      %v1101 = vld [vmem:[#allocation2 + $0x2f8] sm:$0xff]
      %v1102 = vld [vmem:[#allocation8] sm:$0x7]
      %v1104 = vperm.slane %v1102, 0
      %v1105 = vperm.slane %v1102, 1
      %v1106 = vperm.slane %v1102, 2
      %v1110 = vadd.f32 %v1006, %v1104
      %v1111 = vadd.f32 %v1007, %v1105
      %v1112 = vadd.f32 %v1008, %v1106
      %v1113 = vadd.f32 %v1009, %v1104
      %v1114 = vadd.f32 %v1010, %v1105
      %v1115 = vadd.f32 %v1011, %v1106
      %v1116 = vadd.f32 %v1012, %v1104
      %v1117 = vadd.f32 %v1013, %v1105
      %v1118 = vadd.f32 %v1014, %v1106
      %v1119 = vadd.f32 %v1015, %v1104
      %v1120 = vadd.f32 %v1016, %v1105
      %v1121 = vadd.f32 %v1017, %v1106
      %v1122 = vadd.f32 %v1018, %v1104
      %v1123 = vadd.f32 %v1019, %v1105
      %v1124 = vadd.f32 %v1020, %v1106
      %v1125 = vadd.f32 %v1021, %v1104
      %v1126 = vadd.f32 %v1022, %v1105
      %v1127 = vadd.f32 %v1023, %v1106
      %v1128 = vadd.f32 %v1024, %v1104
      %v1129 = vadd.f32 %v1025, %v1105
      %v1130 = vadd.f32 %v1026, %v1106
      %v1131 = vadd.f32 %v1027, %v1104
      %v1132 = vadd.f32 %v1028, %v1105
      %v1133 = vadd.f32 %v1029, %v1106
      %v1134 = vadd.f32 %v1030, %v1104
      %v1135 = vadd.f32 %v1031, %v1105
      %v1136 = vadd.f32 %v1032, %v1106
      %v1137 = vadd.f32 %v1033, %v1104
      %v1138 = vadd.f32 %v1034, %v1105
      %v1139 = vadd.f32 %v1035, %v1106
      %v1140 = vadd.f32 %v1036, %v1104
      %v1141 = vadd.f32 %v1037, %v1105
      %v1142 = vadd.f32 %v1038, %v1106
      %v1143 = vadd.f32 %v1039, %v1104
      %v1144 = vadd.f32 %v1040, %v1105
      %v1145 = vadd.f32 %v1041, %v1106
      %v1146 = vadd.f32 %v1042, %v1104
      %v1147 = vadd.f32 %v1043, %v1105
      %v1148 = vadd.f32 %v1044, %v1106
      %v1149 = vadd.f32 %v1045, %v1104
      %v1150 = vadd.f32 %v1046, %v1105
      %v1151 = vadd.f32 %v1047, %v1106
      %v1152 = vadd.f32 %v1048, %v1104
      %v1153 = vadd.f32 %v1049, %v1105
      %v1154 = vadd.f32 %v1050, %v1106
      %v1155 = vadd.f32 %v1051, %v1104
      %v1156 = vadd.f32 %v1052, %v1105
      %v1157 = vadd.f32 %v1053, %v1106
      %v1158 = vadd.f32 %v1054, %v1104
      %v1159 = vadd.f32 %v1055, %v1105
      %v1160 = vadd.f32 %v1056, %v1106
      %v1161 = vadd.f32 %v1057, %v1104
      %v1162 = vadd.f32 %v1058, %v1105
      %v1163 = vadd.f32 %v1059, %v1106
      %v1164 = vadd.f32 %v1060, %v1104
      %v1165 = vadd.f32 %v1061, %v1105
      %v1166 = vadd.f32 %v1062, %v1106
      %v1167 = vadd.f32 %v1063, %v1104
      %v1168 = vadd.f32 %v1064, %v1105
      %v1169 = vadd.f32 %v1065, %v1106
      %v1170 = vadd.f32 %v1066, %v1104
      %v1171 = vadd.f32 %v1067, %v1105
      %v1172 = vadd.f32 %v1068, %v1106
      %v1173 = vadd.f32 %v1069, %v1104
      %v1174 = vadd.f32 %v1070, %v1105
      %v1175 = vadd.f32 %v1071, %v1106
      %v1176 = vadd.f32 %v1072, %v1104
      %v1177 = vadd.f32 %v1073, %v1105
      %v1178 = vadd.f32 %v1074, %v1106
      %v1179 = vadd.f32 %v1075, %v1104
      %v1180 = vadd.f32 %v1076, %v1105
      %v1181 = vadd.f32 %v1077, %v1106
      %v1182 = vadd.f32 %v1078, %v1104
      %v1183 = vadd.f32 %v1079, %v1105
      %v1184 = vadd.f32 %v1080, %v1106
      %v1185 = vadd.f32 %v1081, %v1104
      %v1186 = vadd.f32 %v1082, %v1105
      %v1187 = vadd.f32 %v1083, %v1106
      %v1188 = vadd.f32 %v1084, %v1104
      %v1189 = vadd.f32 %v1085, %v1105
      %v1190 = vadd.f32 %v1086, %v1106
      %v1191 = vadd.f32 %v1087, %v1104
      %v1192 = vadd.f32 %v1088, %v1105
      %v1193 = vadd.f32 %v1089, %v1106
      %v1194 = vadd.f32 %v1090, %v1104
      %v1195 = vadd.f32 %v1091, %v1105
      %v1196 = vadd.f32 %v1092, %v1106
      %v1197 = vadd.f32 %v1093, %v1104
      %v1198 = vadd.f32 %v1094, %v1105
      %v1199 = vadd.f32 %v1095, %v1106
      %v1200 = vadd.f32 %v1096, %v1104
      %v1201 = vadd.f32 %v1097, %v1105
      %v1202 = vadd.f32 %v1098, %v1106
      %v1203 = vadd.f32 %v1099, %v1104
      %v1204 = vadd.f32 %v1100, %v1105
      %v1205 = vadd.f32 %v1101, %v1106
      %v1206 = vpack.c.bf16 %v1111, %v1110
      %v1207 = vpack.c.bf16 %v1112, %v1112
      %v1208 = vpack.c.bf16 %v1114, %v1113
      %v1209 = vpack.c.bf16 %v1115, %v1115
      %v1210 = vpack.c.bf16 %v1117, %v1116
      %v1211 = vpack.c.bf16 %v1118, %v1118
      %v1212 = vpack.c.bf16 %v1120, %v1119
      %v1213 = vpack.c.bf16 %v1121, %v1121
      %v1214 = vpack.c.bf16 %v1123, %v1122
      %v1215 = vpack.c.bf16 %v1124, %v1124
      %v1216 = vpack.c.bf16 %v1126, %v1125
      %v1217 = vpack.c.bf16 %v1127, %v1127
      %v1218 = vpack.c.bf16 %v1129, %v1128
      %v1219 = vpack.c.bf16 %v1130, %v1130
      %v1220 = vpack.c.bf16 %v1132, %v1131
      %v1221 = vpack.c.bf16 %v1133, %v1133
      %v1222 = vpack.c.bf16 %v1135, %v1134
      %v1223 = vpack.c.bf16 %v1136, %v1136
      %v1224 = vpack.c.bf16 %v1138, %v1137
      %v1225 = vpack.c.bf16 %v1139, %v1139
      %v1226 = vpack.c.bf16 %v1141, %v1140
      %v1227 = vpack.c.bf16 %v1142, %v1142
      %v1228 = vpack.c.bf16 %v1144, %v1143
      %v1229 = vpack.c.bf16 %v1145, %v1145
      %v1230 = vpack.c.bf16 %v1147, %v1146
      %v1231 = vpack.c.bf16 %v1148, %v1148
      %v1232 = vpack.c.bf16 %v1150, %v1149
      %v1233 = vpack.c.bf16 %v1151, %v1151
      %v1234 = vpack.c.bf16 %v1153, %v1152
      %v1235 = vpack.c.bf16 %v1154, %v1154
      %v1236 = vpack.c.bf16 %v1156, %v1155
      %v1237 = vpack.c.bf16 %v1157, %v1157
      %v1238 = vpack.c.bf16 %v1159, %v1158
      %v1239 = vpack.c.bf16 %v1160, %v1160
      %v1240 = vpack.c.bf16 %v1162, %v1161
      %v1241 = vpack.c.bf16 %v1163, %v1163
      %v1242 = vpack.c.bf16 %v1165, %v1164
      %v1243 = vpack.c.bf16 %v1166, %v1166
      %v1244 = vpack.c.bf16 %v1168, %v1167
      %v1245 = vpack.c.bf16 %v1169, %v1169
      %v1246 = vpack.c.bf16 %v1171, %v1170
      %v1247 = vpack.c.bf16 %v1172, %v1172
      %v1248 = vpack.c.bf16 %v1174, %v1173
      %v1249 = vpack.c.bf16 %v1175, %v1175
      %v1250 = vpack.c.bf16 %v1177, %v1176
      %v1251 = vpack.c.bf16 %v1178, %v1178
      %v1252 = vpack.c.bf16 %v1180, %v1179
      %v1253 = vpack.c.bf16 %v1181, %v1181
      %v1254 = vpack.c.bf16 %v1183, %v1182
      %v1255 = vpack.c.bf16 %v1184, %v1184
      %v1256 = vpack.c.bf16 %v1186, %v1185
      %v1257 = vpack.c.bf16 %v1187, %v1187
      %v1258 = vpack.c.bf16 %v1189, %v1188
      %v1259 = vpack.c.bf16 %v1190, %v1190
      %v1260 = vpack.c.bf16 %v1192, %v1191
      %v1261 = vpack.c.bf16 %v1193, %v1193
      %v1262 = vpack.c.bf16 %v1195, %v1194
      %v1263 = vpack.c.bf16 %v1196, %v1196
      %v1264 = vpack.c.bf16 %v1198, %v1197
      %v1265 = vpack.c.bf16 %v1199, %v1199
      %v1266 = vpack.c.bf16 %v1201, %v1200
      %v1267 = vpack.c.bf16 %v1202, %v1202
      %v1268 = vpack.c.bf16 %v1204, %v1203
      %v1269 = vpack.c.bf16 %v1205, %v1205
      %1270 = vst [vmem:[#allocation9] sm:$0xff] %v1206
      %1271 = vst [vmem:[#allocation9 + $0x8] sm:$0xf] %v1207
      %1272 = vst [vmem:[#allocation9 + $0xc] sm:$0xff] %v1208
      %1273 = vst [vmem:[#allocation9 + $0x14] sm:$0xf] %v1209
      %1274 = vst [vmem:[#allocation9 + $0x18] sm:$0xff] %v1210
      %1275 = vst [vmem:[#allocation9 + $0x20] sm:$0xf] %v1211
      %1276 = vst [vmem:[#allocation9 + $0x24] sm:$0xff] %v1212
      %1277 = vst [vmem:[#allocation9 + $0x2c] sm:$0xf] %v1213
      %1278 = vst [vmem:[#allocation9 + $0x30] sm:$0xff] %v1214
      %1279 = vst [vmem:[#allocation9 + $0x38] sm:$0xf] %v1215
      %1280 = vst [vmem:[#allocation9 + $0x3c] sm:$0xff] %v1216
      %1281 = vst [vmem:[#allocation9 + $0x44] sm:$0xf] %v1217
      %1282 = vst [vmem:[#allocation9 + $0x48] sm:$0xff] %v1218
      %1283 = vst [vmem:[#allocation9 + $0x50] sm:$0xf] %v1219
      %1284 = vst [vmem:[#allocation9 + $0x54] sm:$0xff] %v1220
      %1285 = vst [vmem:[#allocation9 + $0x5c] sm:$0xf] %v1221
      %1286 = vst [vmem:[#allocation9 + $0x60] sm:$0xff] %v1222
      %1287 = vst [vmem:[#allocation9 + $0x68] sm:$0xf] %v1223
      %1288 = vst [vmem:[#allocation9 + $0x6c] sm:$0xff] %v1224
      %1289 = vst [vmem:[#allocation9 + $0x74] sm:$0xf] %v1225
      %1290 = vst [vmem:[#allocation9 + $0x78] sm:$0xff] %v1226
      %1291 = vst [vmem:[#allocation9 + $0x80] sm:$0xf] %v1227
      %1292 = vst [vmem:[#allocation9 + $0x84] sm:$0xff] %v1228
      %1293 = vst [vmem:[#allocation9 + $0x8c] sm:$0xf] %v1229
      %1294 = vst [vmem:[#allocation9 + $0x90] sm:$0xff] %v1230
      %1295 = vst [vmem:[#allocation9 + $0x98] sm:$0xf] %v1231
      %1296 = vst [vmem:[#allocation9 + $0x9c] sm:$0xff] %v1232
      %1297 = vst [vmem:[#allocation9 + $0xa4] sm:$0xf] %v1233
      %1298 = vst [vmem:[#allocation9 + $0xa8] sm:$0xff] %v1234
      %1299 = vst [vmem:[#allocation9 + $0xb0] sm:$0xf] %v1235
      %1300 = vst [vmem:[#allocation9 + $0xb4] sm:$0xff] %v1236
      %1301 = vst [vmem:[#allocation9 + $0xbc] sm:$0xf] %v1237
      %1302 = vst [vmem:[#allocation9 + $0xc0] sm:$0xff] %v1238
      %1303 = vst [vmem:[#allocation9 + $0xc8] sm:$0xf] %v1239
      %1304 = vst [vmem:[#allocation9 + $0xcc] sm:$0xff] %v1240
      %1305 = vst [vmem:[#allocation9 + $0xd4] sm:$0xf] %v1241
      %1306 = vst [vmem:[#allocation9 + $0xd8] sm:$0xff] %v1242
      %1307 = vst [vmem:[#allocation9 + $0xe0] sm:$0xf] %v1243
      %1308 = vst [vmem:[#allocation9 + $0xe4] sm:$0xff] %v1244
      %1309 = vst [vmem:[#allocation9 + $0xec] sm:$0xf] %v1245
      %1310 = vst [vmem:[#allocation9 + $0xf0] sm:$0xff] %v1246
      %1311 = vst [vmem:[#allocation9 + $0xf8] sm:$0xf] %v1247
      %1312 = vst [vmem:[#allocation9 + $0xfc] sm:$0xff] %v1248
      %1313 = vst [vmem:[#allocation9 + $0x104] sm:$0xf] %v1249
      %1314 = vst [vmem:[#allocation9 + $0x108] sm:$0xff] %v1250
      %1315 = vst [vmem:[#allocation9 + $0x110] sm:$0xf] %v1251
      %1316 = vst [vmem:[#allocation9 + $0x114] sm:$0xff] %v1252
      %1317 = vst [vmem:[#allocation9 + $0x11c] sm:$0xf] %v1253
      %1318 = vst [vmem:[#allocation9 + $0x120] sm:$0xff] %v1254
      %1319 = vst [vmem:[#allocation9 + $0x128] sm:$0xf] %v1255
      %1320 = vst [vmem:[#allocation9 + $0x12c] sm:$0xff] %v1256
      %1321 = vst [vmem:[#allocation9 + $0x134] sm:$0xf] %v1257
      %1322 = vst [vmem:[#allocation9 + $0x138] sm:$0xff] %v1258
      %1323 = vst [vmem:[#allocation9 + $0x140] sm:$0xf] %v1259
      %1324 = vst [vmem:[#allocation9 + $0x144] sm:$0xff] %v1260
      %1325 = vst [vmem:[#allocation9 + $0x14c] sm:$0xf] %v1261
      %1326 = vst [vmem:[#allocation9 + $0x150] sm:$0xff] %v1262
      %1327 = vst [vmem:[#allocation9 + $0x158] sm:$0xf] %v1263
      %1328 = vst [vmem:[#allocation9 + $0x15c] sm:$0xff] %v1264
      %1329 = vst [vmem:[#allocation9 + $0x164] sm:$0xf] %v1265
      %1330 = vst [vmem:[#allocation9 + $0x168] sm:$0xff] %v1266
      %1331 = vst [vmem:[#allocation9 + $0x170] sm:$0xf] %v1267
      %1332 = vst [vmem:[#allocation9 + $0x174] sm:$0xff] %v1268
      %1333 = vst [vmem:[#allocation9 + $0x17c] sm:$0xf] %v1269
    $region33: #{tpu_custom_call.1} parent=1 // pred_fallthru
      _
    // Predicated region
    $region34: #{tpu_custom_call.1} parent=1 // pred_check
      _
    $region35: #{tpu_custom_call.1} parent=1 // pred_check_branch
      %1335 = sbr.rel (0) target = $region37
    $region36: #{tpu_custom_call.1} parent=1 // pred_region
      %1337 = vsyncadd [#allocation5], 0
      %s1338 = sshll.u32 [#allocation9], 4
      %s1339 = int_to_ptr.vmem [resolvable:$true] %s1338
      %s1340 = sshll.u32 %s3, 4
      %s1341 = int_to_ptr.hbm [resolvable:$true] %s1340
      %1346 = dma.vmem_to_hbm [thread:$0]  %s1339, 6144, %s1341, [#allocation5], 192, 192, 12
    $region37: #{tpu_custom_call.1} parent=1 // pred_fallthru
      _
    // Predicated region
    $region38: #{tpu_custom_call.1} parent=1 // pred_check
      _
    $region39: #{tpu_custom_call.1} parent=1 // pred_check_branch
      %1348 = sbr.rel (0) target = $region41
    $region40: #{tpu_custom_call.1} parent=1 // pred_region
      %1350 = dma.done [#allocation5], 6144
    $region41: #{tpu_custom_call.1} parent=1 // pred_fallthru
      _
    %1351 = vsyncpa [#allocation4], 1
    %1352 = vsyncpa [#allocation7], 1
    %1353 = vsyncpa [#allocation5], 1

</llo_original>
